<compile_context>
chip_gen: v7x
topology: tpu7x:2x2x1
jax: 0.10.0
libtpu: 0.0.40
codegen_flags: <defaults>
</compile_context>

<pallas_src>
import functools

import jax
import jax.numpy as jnp
from jax.experimental import pallas as pl
from jax.experimental.pallas import tpu as pltpu


# ----------------------------------------------------------------------------
# Helpers
# ----------------------------------------------------------------------------
def _nbytes(a):
    return int(a.size) * jnp.dtype(a.dtype).itemsize


def _pick_batch_tile(B, batch_tile=None):
    """Lane-axis (batch) tile size.

    * B <= 256: one tile holding the whole batch (fewest grid steps; best on the
      single-TC v5e/v6e and fine on v7x at tiny batches).
    * 256 < B <= 2048: split into ~2 tiles, 128-lane aligned, so the "parallel"
      batch axis shards across v7x's two TensorCores.
    * B > 2048: 1024-lane tiles (per-step overhead amortized, >=2 tiles).
    """
    if batch_tile is not None:
        return batch_tile
    if B <= 256:
        return B
    if B <= 2048:
        half = -(-B // 2)
        return max(128, ((half + 127) // 128) * 128)
    return 1024


# ----------------------------------------------------------------------------
# Fused kernel: embedding MLP + full conditional affine-coupling flow.
# All activations are feature-major: (features, batch_tile); batch on the lanes.
# ----------------------------------------------------------------------------
def _fused_flow_kernel(n_layers, d_id, d_tr, ctx_dim, fma_max_k,
                       xT_ref, taT_ref, tbT_ref,
                       ew1T_ref, eb1T_ref, ew2T_ref, eb2T_ref,
                       w1aT_ref, w1bT_ref, b1T_ref,
                       w2sT_ref, w2cT_ref, b2sT_ref, b2cT_ref,
                       out_ref):
    f32 = jnp.float32

    def mm(wT, act, k):
        # wT: (out_features, k), act: (k, TB) -> (out_features, TB)
        if k <= fma_max_k:
            # VPU broadcast-FMA rank-1 updates: avoids an MXU push/pop round trip
            # for contractions that use <2% of the MXU depth.
            acc = wT[:, 0:1] * act[0:1, :]
            for j in range(1, k):
                acc = acc + wT[:, j:j + 1] * act[j:j + 1, :]
            return acc.astype(f32)
        return jnp.dot(wT, act.astype(wT.dtype), preferred_element_type=f32)

    # ---- embedding:  ctx^T = W2^T @ relu(W1^T @ x^T + b1^T) + b2^T  ----
    h = mm(ew1T_ref[...], xT_ref[...], xT_ref.shape[0])
    h = jnp.maximum(h + eb1T_ref[...], 0.0)
    ctx = mm(ew2T_ref[...], h, h.shape[0]) + eb2T_ref[...]

    # theta halves stay resident as (features, TB) values; ping-pong per layer.
    za = taT_ref[...]                                   # (d_id, TB)
    zb = tbT_ref[...]                                   # (d_tr, TB)
    lad = jnp.zeros((1, out_ref.shape[1]), f32)         # lane-dense accumulator

    # Static unroll over coupling layers; leading-axis indexing with a Python int
    # is a free static slice of the stacked weights.
    for i in range(n_layers):
        x_id, x_tr = (za, zb) if i % 2 == 0 else (zb, za)

        hh = (mm(w1aT_ref[i], x_id, d_id)
              + mm(w1bT_ref[i], ctx, ctx_dim)
              + b1T_ref[i])
        hh = jnp.maximum(hh, 0.0)

        shift = mm(w2sT_ref[i], hh, hh.shape[0]) + b2sT_ref[i]
        # +2.0 already folded into b2cT at pack time.
        us = mm(w2cT_ref[i], hh, hh.shape[0]) + b2cT_ref[i]

        scale = jax.nn.sigmoid(us) + 1e-3               # EUP path; scale in (1e-3, 1.003)
        y = x_tr * scale + shift
        # Sublane (feature-axis) reduction; tiny (d_tr rows), no cross-lane XLU work.
        lad = lad + jnp.sum(jnp.log(scale), axis=0, keepdims=True)

        if i % 2 == 0:
            zb = y                                       # z = [x_id, y_tr]
        else:
            za = y                                       # z = [y_tr, x_id]

    # Single combined store: rows [0:d_id]=za, [d_id:D]=zb, [D]=logabsdet.
    out_ref[...] = jnp.concatenate([za, zb, lad], axis=0)


def glasflow_forward(theta, x, emb_T, packed, *, batch_tile=None, fma_max_k=8):
    """Fused (noise, logabsdet) forward. Weights arrive pre-transposed / stacked."""
    B, D = theta.shape
    assert D % 2 == 0, "fused kernel assumes even theta_dim (d_id == d_tr)"
    d_id = D // 2
    d_tr = D - d_id
    x_dim = x.shape[1]
    emb_hidden = emb_T["w1T"].shape[0]
    ctx_dim = emb_T["w2T"].shape[0]
    n_layers = packed["w1aT"].shape[0]
    cond_hidden = packed["w1aT"].shape[1]

    # Feature-major activations: batch on the 128-lane axis. Tiny XLA transposes.
    xT = x.T                              # (x_dim, B)
    taT = theta[:, :d_id].T               # (d_id, B)
    tbT = theta[:, d_id:].T               # (d_tr, B)

    tb = _pick_batch_tile(B, batch_tile)
    grid = (pl.cdiv(B, tb),)

    # NOTE: partial trailing batch tiles compute on padded lanes. This is safe ONLY
    # because every op is lane-independent (no cross-batch reduction) and scale is
    # bounded in (1e-3, 1.003), so no log(0)/NaN; padded lanes are masked on store.
    featmaj = lambda d: pl.BlockSpec((d, tb), lambda i: (0, i))
    const2 = lambda a: pl.BlockSpec(a.shape, lambda i: (0, 0))
    const3 = lambda a: pl.BlockSpec(a.shape, lambda i: (0, 0, 0))

    out_rows = D + 1   # D noise feature rows + 1 logabsdet row, all lane-dense.

    flops = 2 * B * (x_dim * emb_hidden + emb_hidden * ctx_dim
                     + n_layers * (d_id * cond_hidden + ctx_dim * cond_hidden
                                   + 2 * cond_hidden * d_tr))
    transcendentals = n_layers * B * 2 * d_tr
    weight_bytes = sum(_nbytes(emb_T[k]) for k in emb_T) \
        + sum(_nbytes(packed[k]) for k in packed)
    bytes_accessed = 4 * (x.size + theta.size + out_rows * B) + weight_bytes

    # Budget VMEM explicitly (valid on v7x's 64 MiB as well as v5e/v6e's 128 MiB):
    # double-buffered batch tiles + weights + activation temporaries, with headroom.
    act_bytes = 4 * tb * (x_dim + D + out_rows + 2 * emb_hidden + ctx_dim
                          + 2 * cond_hidden + 4 * d_tr)
    vmem_limit = int(min(64 * 1024 * 1024,
                         max(16 * 1024 * 1024, 4 * (weight_bytes + act_bytes))))

    kern = functools.partial(_fused_flow_kernel, n_layers, d_id, d_tr, ctx_dim,
                             fma_max_k)
    out = pl.pallas_call(
        kern,
        grid=grid,
        in_specs=[featmaj(x_dim), featmaj(d_id), featmaj(d_tr),
                  const2(emb_T["w1T"]), const2(emb_T["b1T"]),
                  const2(emb_T["w2T"]), const2(emb_T["b2T"]),
                  const3(packed["w1aT"]), const3(packed["w1bT"]),
                  const3(packed["b1T"]),
                  const3(packed["w2sT"]), const3(packed["w2cT"]),
                  const3(packed["b2sT"]), const3(packed["b2cT"])],
        out_specs=pl.BlockSpec((out_rows, tb), lambda i: (0, i)),
        out_shape=jax.ShapeDtypeStruct((out_rows, B), jnp.float32),
        compiler_params=pltpu.CompilerParams(
            dimension_semantics=("parallel",),
            vmem_limit_bytes=vmem_limit),
        cost_estimate=pl.CostEstimate(
            flops=flops, transcendentals=transcendentals,
            bytes_accessed=bytes_accessed),
    )(xT, taT, tbT,
      emb_T["w1T"], emb_T["b1T"], emb_T["w2T"], emb_T["b2T"],
      packed["w1aT"], packed["w1bT"], packed["b1T"],
      packed["w2sT"], packed["w2cT"], packed["b2sT"], packed["b2cT"])

    noise = out[:D, :].T          # one tiny transpose; no concat kernel, no extra copy
    logabsdet = out[D, :]
    return noise, logabsdet


# ----------------------------------------------------------------------------
# Standalone embedding kernel (only used by .condition(); forward() is fused).
# Also feature-major so the narrow ctx output is written lane-dense.
# ----------------------------------------------------------------------------
def _embedding_kernel(xT_ref, w1T_ref, b1T_ref, w2T_ref, b2T_ref, outT_ref):
    h = jnp.dot(w1T_ref[...], xT_ref[...].astype(w1T_ref.dtype),
                preferred_element_type=jnp.float32)
    h = jnp.maximum(h + b1T_ref[...], 0.0)
    outT_ref[...] = (jnp.dot(w2T_ref[...], h.astype(w2T_ref.dtype),
                             preferred_element_type=jnp.float32) + b2T_ref[...])


def embedding_forward(x, emb_T, *, batch_tile=None):
    B, x_dim = x.shape
    C = emb_T["w2T"].shape[0]
    tb = _pick_batch_tile(B, batch_tile)
    const2 = lambda a: pl.BlockSpec(a.shape, lambda i: (0, 0))
    outT = pl.pallas_call(
        _embedding_kernel,
        grid=(pl.cdiv(B, tb),),
        in_specs=[pl.BlockSpec((x_dim, tb), lambda i: (0, i)),
                  const2(emb_T["w1T"]), const2(emb_T["b1T"]),
                  const2(emb_T["w2T"]), const2(emb_T["b2T"])],
        out_specs=pl.BlockSpec((C, tb), lambda i: (0, i)),
        out_shape=jax.ShapeDtypeStruct((C, B), jnp.float32),
        compiler_params=pltpu.CompilerParams(dimension_semantics=("parallel",)),
    )(x.T, emb_T["w1T"], emb_T["b1T"], emb_T["w2T"], emb_T["b2T"])
    return outT.T


# ----------------------------------------------------------------------------
# GlasflowEmbdding.forward(theta, x) -> (noise, logabsdet)
# ----------------------------------------------------------------------------
class GlasflowEmbeddingPallas:
    def __init__(self, emb_params, flow_layers, theta_dim, *, use_bf16_matmul=False):
        self.theta_dim = theta_dim
        d_id = theta_dim // 2
        d_tr = theta_dim - d_id
        wdt = jnp.bfloat16 if use_bf16_matmul else jnp.float32
        # Pack once: transposed (feature-major) weights, stacked leading layer axis,
        # shift/scale split of w2, and the +2.0 sigmoid offset folded into b2c.
        # Biases stay f32 (elementwise path).
        self.emb_T = {
            "w1T": jnp.asarray(emb_params["w1"].T, wdt),          # (H_e, x_dim)
            "b1T": jnp.asarray(emb_params["b1"].T, jnp.float32),  # (H_e, 1)
            "w2T": jnp.asarray(emb_params["w2"].T, wdt),          # (ctx, H_e)
            "b2T": jnp.asarray(emb_params["b2"].T, jnp.float32),  # (ctx, 1)
        }
        self.packed = {
            "w1aT": jnp.stack([p["w1a"].T for p in flow_layers]).astype(wdt),          # (N,H,d_id)
            "w1bT": jnp.stack([p["w1b"].T for p in flow_layers]).astype(wdt),          # (N,H,ctx)
            "b1T":  jnp.stack([p["b1"].T for p in flow_layers]).astype(jnp.float32),   # (N,H,1)
            "w2sT": jnp.stack([p["w2"][:, :d_tr].T for p in flow_layers]).astype(wdt),  # (N,d_tr,H)
            "w2cT": jnp.stack([p["w2"][:, d_tr:].T for p in flow_layers]).astype(wdt),  # (N,d_tr,H)
            "b2sT": jnp.stack([p["b2"][:, :d_tr].T for p in flow_layers]).astype(jnp.float32),
            "b2cT": jnp.stack([p["b2"][:, d_tr:].T + 2.0
                               for p in flow_layers]).astype(jnp.float32),              # +2 folded
        }

    def condition(self, x):
        return embedding_forward(x, self.emb_T)

    def forward(self, theta, x):
        return glasflow_forward(theta, x, self.emb_T, self.packed)


# ----------------------------------------------------------------------------
# Deterministic parameter construction + pure-JAX reference check
# ----------------------------------------------------------------------------
def _dense_init(key, fan_in, fan_out):
    return jax.random.normal(key, (fan_in, fan_out), jnp.float32) / jnp.sqrt(fan_in)


def build_params(key, x_dim, emb_hidden, ctx_dim, theta_dim, cond_hidden, n_layers):
    keys = jax.random.split(key, 4 + 4 * n_layers)
    emb = {
        "w1": _dense_init(keys[0], x_dim, emb_hidden),
        "b1": 0.01 * jax.random.normal(keys[1], (1, emb_hidden), jnp.float32),
        "w2": _dense_init(keys[2], emb_hidden, ctx_dim),
        "b2": 0.01 * jax.random.normal(keys[3], (1, ctx_dim), jnp.float32),
    }
    d_id = theta_dim // 2
    d_tr = theta_dim - d_id
    layers = []
    for i in range(n_layers):
        k = keys[4 + 4 * i: 8 + 4 * i]
        layers.append({
            "w1a": _dense_init(k[0], d_id, cond_hidden),
            "w1b": _dense_init(k[1], ctx_dim, cond_hidden),
            "b1": 0.01 * jax.random.normal(k[2], (1, cond_hidden), jnp.float32),
            "w2": _dense_init(k[3], cond_hidden, 2 * d_tr),
            "b2": jnp.zeros((1, 2 * d_tr), jnp.float32),
        })
    return emb, layers


def reference_forward(theta, x, emb, layers):
    h = jnp.maximum(x @ emb["w1"] + emb["b1"], 0.0)
    ctx = h @ emb["w2"] + emb["b2"]
    B, D = theta.shape
    d_id = D // 2
    z = theta
    lad = jnp.zeros((B,), jnp.float32)

    def couple(x_id, x_tr, p):
        hh = jnp.maximum(x_id @ p["w1a"] + ctx @ p["w1b"] + p["b1"], 0.0)
        params = hh @ p["w2"] + p["b2"]
        d_tr = x_tr.shape[1]
        shift, us = params[:, :d_tr], params[:, d_tr:]
        scale = jax.nn.sigmoid(us + 2.0) + 1e-3
        return x_tr * scale + shift, jnp.sum(jnp.log(scale), axis=-1)

    for i, p in enumerate(layers):
        if i % 2 == 0:
            x_id, x_tr = z[:, :d_id], z[:, d_id:]
            y, l = couple(x_id, x_tr, p)
            z = jnp.concatenate([x_id, y], axis=-1)
        else:
            x_tr, x_id = z[:, : D - d_id], z[:, D - d_id:]
            y, l = couple(x_id, x_tr, p)
            z = jnp.concatenate([y, x_id], axis=-1)
        lad = lad + l
    return z, lad


if __name__ == "__main__":
    B = 8          # batch
    X_DIM = 16     # data / observation dim
    THETA_DIM = 4  # flow feature dim
    EMB_HIDDEN = 32
    CTX_DIM = 8
    COND_HIDDEN = 32
    N_LAYERS = 4

    key = jax.random.PRNGKey(0)
    k_x, k_t, k_p = jax.random.split(key, 3)
    x = jax.random.normal(k_x, (B, X_DIM), jnp.float32)
    theta = jax.random.normal(k_t, (B, THETA_DIM), jnp.float32)

    emb_params, flow_layers = build_params(
        k_p, X_DIM, EMB_HIDDEN, CTX_DIM, THETA_DIM, COND_HIDDEN, N_LAYERS)

    model = GlasflowEmbeddingPallas(emb_params, flow_layers, THETA_DIM)
    noise, logabsdet = model.forward(theta, x)
    noise = jax.block_until_ready(noise)
    logabsdet = jax.block_until_ready(logabsdet)

    # condition() path (standalone embedding kernel) also exercised once.
    ctx = jax.block_until_ready(model.condition(x))

    ref_noise, ref_lad = reference_forward(theta, x, emb_params, flow_layers)
    ref_ctx = (jnp.maximum(x @ emb_params["w1"] + emb_params["b1"], 0.0)
               @ emb_params["w2"] + emb_params["b2"])
    assert noise.shape == (B, THETA_DIM) and logabsdet.shape == (B,)
    assert jnp.allclose(noise, ref_noise, atol=1e-4, rtol=1e-4)
    assert jnp.allclose(logabsdet, ref_lad, atol=1e-4, rtol=1e-4)
    assert jnp.allclose(ctx, ref_ctx, atol=1e-4, rtol=1e-4)

    print("KERNEL_OK")
</pallas_src>

<mosaic_0001>
module attributes {stable_mosaic.version = 11 : i64} {
  func.func @_fused_flow_kernel(%arg0: i32, %arg1: memref<16x8xf32, #tpu.memory_space<vmem>>, %arg2: memref<2x8xf32, #tpu.memory_space<vmem>>, %arg3: memref<2x8xf32, #tpu.memory_space<vmem>>, %arg4: memref<32x16xf32, #tpu.memory_space<vmem>>, %arg5: memref<32x1xf32, #tpu.memory_space<vmem>>, %arg6: memref<8x32xf32, #tpu.memory_space<vmem>>, %arg7: memref<8x1xf32, #tpu.memory_space<vmem>>, %arg8: memref<4x32x2xf32, #tpu.memory_space<vmem>>, %arg9: memref<4x32x8xf32, #tpu.memory_space<vmem>>, %arg10: memref<4x32x1xf32, #tpu.memory_space<vmem>>, %arg11: memref<4x2x32xf32, #tpu.memory_space<vmem>>, %arg12: memref<4x2x32xf32, #tpu.memory_space<vmem>>, %arg13: memref<4x2x1xf32, #tpu.memory_space<vmem>>, %arg14: memref<4x2x1xf32, #tpu.memory_space<vmem>>, %arg15: memref<5x8xf32, #tpu.memory_space<vmem>>) attributes {dimension_semantics = [#tpu.dimension_semantics<parallel>], iteration_bounds = array<i64: 1>, scalar_prefetch = 0 : i64, scratch_operands = 0 : i64, tpu.core_type = #tpu.core_type<tc>, window_params = [{transform_indices = @transform_0, window_bounds = array<i64: 16, 8>}, {transform_indices = @transform_1, window_bounds = array<i64: 2, 8>}, {transform_indices = @transform_2, window_bounds = array<i64: 2, 8>}, {pipeline_mode = #tpu.pipeline_mode<synchronous>, transform_indices = @transform_3, window_bounds = array<i64: 32, 16>}, {pipeline_mode = #tpu.pipeline_mode<synchronous>, transform_indices = @transform_4, window_bounds = array<i64: 32, 1>}, {pipeline_mode = #tpu.pipeline_mode<synchronous>, transform_indices = @transform_5, window_bounds = array<i64: 8, 32>}, {pipeline_mode = #tpu.pipeline_mode<synchronous>, transform_indices = @transform_6, window_bounds = array<i64: 8, 1>}, {pipeline_mode = #tpu.pipeline_mode<synchronous>, transform_indices = @transform_7, window_bounds = array<i64: 4, 32, 2>}, {pipeline_mode = #tpu.pipeline_mode<synchronous>, transform_indices = @transform_8, window_bounds = array<i64: 4, 32, 8>}, {pipeline_mode = #tpu.pipeline_mode<synchronous>, transform_indices = @transform_9, window_bounds = array<i64: 4, 32, 1>}, {pipeline_mode = #tpu.pipeline_mode<synchronous>, transform_indices = @transform_10, window_bounds = array<i64: 4, 2, 32>}, {pipeline_mode = #tpu.pipeline_mode<synchronous>, transform_indices = @transform_11, window_bounds = array<i64: 4, 2, 32>}, {pipeline_mode = #tpu.pipeline_mode<synchronous>, transform_indices = @transform_12, window_bounds = array<i64: 4, 2, 1>}, {pipeline_mode = #tpu.pipeline_mode<synchronous>, transform_indices = @transform_13, window_bounds = array<i64: 4, 2, 1>}, {transform_indices = @transform_14, window_bounds = array<i64: 5, 8>}]} {
    %c0 = arith.constant 0 : index
    %c0_0 = arith.constant 0 : index
    %0 = vector.load %arg4[%c0, %c0_0] : memref<32x16xf32, #tpu.memory_space<vmem>>, vector<32x16xf32>
    %c0_1 = arith.constant 0 : index
    %c0_2 = arith.constant 0 : index
    %1 = vector.load %arg1[%c0_1, %c0_2] : memref<16x8xf32, #tpu.memory_space<vmem>>, vector<16x8xf32>
    %cst = arith.constant dense<0.000000e+00> : vector<32x8xf32>
    %2 = tpu.matmul %0, %1, %cst {dimension_numbers = #tpu.dot_dimension_numbers<[1], [0], [0], [1], [0, 0, 1, 1], [], []>} : vector<32x16xf32>, vector<16x8xf32>, vector<32x8xf32> -> vector<32x8xf32>
    %c0_3 = arith.constant 0 : index
    %c0_4 = arith.constant 0 : index
    %3 = vector.load %arg5[%c0_3, %c0_4] : memref<32x1xf32, #tpu.memory_space<vmem>>, vector<32x1xf32>
    %4 = vector.broadcast %3 : vector<32x1xf32> to vector<32x8xf32>
    %5 = arith.addf %2, %4 : vector<32x8xf32>
    %cst_5 = arith.constant 0.000000e+00 : f32
    %6 = vector.broadcast %cst_5 : f32 to vector<32x8xf32>
    %7 = arith.maximumf %5, %6 : vector<32x8xf32>
    %c0_6 = arith.constant 0 : index
    %c0_7 = arith.constant 0 : index
    %8 = vector.load %arg6[%c0_6, %c0_7] : memref<8x32xf32, #tpu.memory_space<vmem>>, vector<8x32xf32>
    %cst_8 = arith.constant dense<0.000000e+00> : vector<8x8xf32>
    %9 = tpu.matmul %8, %7, %cst_8 {dimension_numbers = #tpu.dot_dimension_numbers<[1], [0], [0], [1], [0, 0, 1, 1], [], []>} : vector<8x32xf32>, vector<32x8xf32>, vector<8x8xf32> -> vector<8x8xf32>
    %c0_9 = arith.constant 0 : index
    %c0_10 = arith.constant 0 : index
    %10 = vector.load %arg7[%c0_9, %c0_10] : memref<8x1xf32, #tpu.memory_space<vmem>>, vector<8x1xf32>
    %11 = vector.broadcast %10 : vector<8x1xf32> to vector<8x8xf32>
    %12 = arith.addf %9, %11 : vector<8x8xf32>
    %c0_11 = arith.constant 0 : index
    %c0_12 = arith.constant 0 : index
    %13 = vector.load %arg2[%c0_11, %c0_12] : memref<2x8xf32, #tpu.memory_space<vmem>>, vector<2x8xf32>
    %c0_13 = arith.constant 0 : index
    %c0_14 = arith.constant 0 : index
    %14 = vector.load %arg3[%c0_13, %c0_14] : memref<2x8xf32, #tpu.memory_space<vmem>>, vector<2x8xf32>
    %cst_15 = arith.constant 0.000000e+00 : f32
    %15 = vector.broadcast %cst_15 : f32 to vector<1x8xf32>
    %c0_16 = arith.constant 0 : index
    %c0_17 = arith.constant 0 : index
    %c0_18 = arith.constant 0 : index
    %16 = vector.load %arg8[%c0_16, %c0_17, %c0_18] : memref<4x32x2xf32, #tpu.memory_space<vmem>>, vector<1x32x2xf32>
    %17 = vector.shape_cast %16 : vector<1x32x2xf32> to vector<32x2xf32>
    %18 = vector.extract_strided_slice %17 {offsets = [0, 0], sizes = [32, 1], strides = [1, 1]} : vector<32x2xf32> to vector<32x1xf32>
    %19 = vector.extract_strided_slice %13 {offsets = [0, 0], sizes = [1, 8], strides = [1, 1]} : vector<2x8xf32> to vector<1x8xf32>
    %20 = vector.broadcast %18 : vector<32x1xf32> to vector<32x8xf32>
    %21 = vector.broadcast %19 : vector<1x8xf32> to vector<32x8xf32>
    %22 = arith.mulf %20, %21 : vector<32x8xf32>
    %23 = vector.extract_strided_slice %17 {offsets = [0, 1], sizes = [32, 1], strides = [1, 1]} : vector<32x2xf32> to vector<32x1xf32>
    %24 = vector.extract_strided_slice %13 {offsets = [1, 0], sizes = [1, 8], strides = [1, 1]} : vector<2x8xf32> to vector<1x8xf32>
    %25 = vector.broadcast %23 : vector<32x1xf32> to vector<32x8xf32>
    %26 = vector.broadcast %24 : vector<1x8xf32> to vector<32x8xf32>
    %27 = arith.mulf %25, %26 : vector<32x8xf32>
    %28 = arith.addf %22, %27 : vector<32x8xf32>
    %c0_19 = arith.constant 0 : index
    %c0_20 = arith.constant 0 : index
    %c0_21 = arith.constant 0 : index
    %29 = vector.load %arg9[%c0_19, %c0_20, %c0_21] : memref<4x32x8xf32, #tpu.memory_space<vmem>>, vector<1x32x8xf32>
    %30 = vector.shape_cast %29 : vector<1x32x8xf32> to vector<32x8xf32>
    %31 = vector.extract_strided_slice %30 {offsets = [0, 0], sizes = [32, 1], strides = [1, 1]} : vector<32x8xf32> to vector<32x1xf32>
    %32 = vector.extract_strided_slice %12 {offsets = [0, 0], sizes = [1, 8], strides = [1, 1]} : vector<8x8xf32> to vector<1x8xf32>
    %33 = vector.broadcast %31 : vector<32x1xf32> to vector<32x8xf32>
    %34 = vector.broadcast %32 : vector<1x8xf32> to vector<32x8xf32>
    %35 = arith.mulf %33, %34 : vector<32x8xf32>
    %36 = vector.extract_strided_slice %30 {offsets = [0, 1], sizes = [32, 1], strides = [1, 1]} : vector<32x8xf32> to vector<32x1xf32>
    %37 = vector.extract_strided_slice %12 {offsets = [1, 0], sizes = [1, 8], strides = [1, 1]} : vector<8x8xf32> to vector<1x8xf32>
    %38 = vector.broadcast %36 : vector<32x1xf32> to vector<32x8xf32>
    %39 = vector.broadcast %37 : vector<1x8xf32> to vector<32x8xf32>
    %40 = arith.mulf %38, %39 : vector<32x8xf32>
    %41 = arith.addf %35, %40 : vector<32x8xf32>
    %42 = vector.extract_strided_slice %30 {offsets = [0, 2], sizes = [32, 1], strides = [1, 1]} : vector<32x8xf32> to vector<32x1xf32>
    %43 = vector.extract_strided_slice %12 {offsets = [2, 0], sizes = [1, 8], strides = [1, 1]} : vector<8x8xf32> to vector<1x8xf32>
    %44 = vector.broadcast %42 : vector<32x1xf32> to vector<32x8xf32>
    %45 = vector.broadcast %43 : vector<1x8xf32> to vector<32x8xf32>
    %46 = arith.mulf %44, %45 : vector<32x8xf32>
    %47 = arith.addf %41, %46 : vector<32x8xf32>
    %48 = vector.extract_strided_slice %30 {offsets = [0, 3], sizes = [32, 1], strides = [1, 1]} : vector<32x8xf32> to vector<32x1xf32>
    %49 = vector.extract_strided_slice %12 {offsets = [3, 0], sizes = [1, 8], strides = [1, 1]} : vector<8x8xf32> to vector<1x8xf32>
    %50 = vector.broadcast %48 : vector<32x1xf32> to vector<32x8xf32>
    %51 = vector.broadcast %49 : vector<1x8xf32> to vector<32x8xf32>
    %52 = arith.mulf %50, %51 : vector<32x8xf32>
    %53 = arith.addf %47, %52 : vector<32x8xf32>
    %54 = vector.extract_strided_slice %30 {offsets = [0, 4], sizes = [32, 1], strides = [1, 1]} : vector<32x8xf32> to vector<32x1xf32>
    %55 = vector.extract_strided_slice %12 {offsets = [4, 0], sizes = [1, 8], strides = [1, 1]} : vector<8x8xf32> to vector<1x8xf32>
    %56 = vector.broadcast %54 : vector<32x1xf32> to vector<32x8xf32>
    %57 = vector.broadcast %55 : vector<1x8xf32> to vector<32x8xf32>
    %58 = arith.mulf %56, %57 : vector<32x8xf32>
    %59 = arith.addf %53, %58 : vector<32x8xf32>
    %60 = vector.extract_strided_slice %30 {offsets = [0, 5], sizes = [32, 1], strides = [1, 1]} : vector<32x8xf32> to vector<32x1xf32>
    %61 = vector.extract_strided_slice %12 {offsets = [5, 0], sizes = [1, 8], strides = [1, 1]} : vector<8x8xf32> to vector<1x8xf32>
    %62 = vector.broadcast %60 : vector<32x1xf32> to vector<32x8xf32>
    %63 = vector.broadcast %61 : vector<1x8xf32> to vector<32x8xf32>
    %64 = arith.mulf %62, %63 : vector<32x8xf32>
    %65 = arith.addf %59, %64 : vector<32x8xf32>
    %66 = vector.extract_strided_slice %30 {offsets = [0, 6], sizes = [32, 1], strides = [1, 1]} : vector<32x8xf32> to vector<32x1xf32>
    %67 = vector.extract_strided_slice %12 {offsets = [6, 0], sizes = [1, 8], strides = [1, 1]} : vector<8x8xf32> to vector<1x8xf32>
    %68 = vector.broadcast %66 : vector<32x1xf32> to vector<32x8xf32>
    %69 = vector.broadcast %67 : vector<1x8xf32> to vector<32x8xf32>
    %70 = arith.mulf %68, %69 : vector<32x8xf32>
    %71 = arith.addf %65, %70 : vector<32x8xf32>
    %72 = vector.extract_strided_slice %30 {offsets = [0, 7], sizes = [32, 1], strides = [1, 1]} : vector<32x8xf32> to vector<32x1xf32>
    %73 = vector.extract_strided_slice %12 {offsets = [7, 0], sizes = [1, 8], strides = [1, 1]} : vector<8x8xf32> to vector<1x8xf32>
    %74 = vector.broadcast %72 : vector<32x1xf32> to vector<32x8xf32>
    %75 = vector.broadcast %73 : vector<1x8xf32> to vector<32x8xf32>
    %76 = arith.mulf %74, %75 : vector<32x8xf32>
    %77 = arith.addf %71, %76 : vector<32x8xf32>
    %78 = arith.addf %28, %77 : vector<32x8xf32>
    %c0_22 = arith.constant 0 : index
    %c0_23 = arith.constant 0 : index
    %c0_24 = arith.constant 0 : index
    %79 = vector.load %arg10[%c0_22, %c0_23, %c0_24] : memref<4x32x1xf32, #tpu.memory_space<vmem>>, vector<1x32x1xf32>
    %80 = vector.shape_cast %79 : vector<1x32x1xf32> to vector<32x1xf32>
    %81 = vector.broadcast %80 : vector<32x1xf32> to vector<32x8xf32>
    %82 = arith.addf %78, %81 : vector<32x8xf32>
    %cst_25 = arith.constant 0.000000e+00 : f32
    %83 = vector.broadcast %cst_25 : f32 to vector<32x8xf32>
    %84 = arith.maximumf %82, %83 : vector<32x8xf32>
    %c0_26 = arith.constant 0 : index
    %c0_27 = arith.constant 0 : index
    %c0_28 = arith.constant 0 : index
    %85 = vector.load %arg11[%c0_26, %c0_27, %c0_28] : memref<4x2x32xf32, #tpu.memory_space<vmem>>, vector<1x2x32xf32>
    %86 = vector.shape_cast %85 : vector<1x2x32xf32> to vector<2x32xf32>
    %cst_29 = arith.constant dense<0.000000e+00> : vector<2x8xf32>
    %87 = tpu.matmul %86, %84, %cst_29 {dimension_numbers = #tpu.dot_dimension_numbers<[1], [0], [0], [1], [0, 0, 1, 1], [], []>} : vector<2x32xf32>, vector<32x8xf32>, vector<2x8xf32> -> vector<2x8xf32>
    %c0_30 = arith.constant 0 : index
    %c0_31 = arith.constant 0 : index
    %c0_32 = arith.constant 0 : index
    %88 = vector.load %arg13[%c0_30, %c0_31, %c0_32] : memref<4x2x1xf32, #tpu.memory_space<vmem>>, vector<1x2x1xf32>
    %89 = vector.shape_cast %88 : vector<1x2x1xf32> to vector<2x1xf32>
    %90 = vector.broadcast %89 : vector<2x1xf32> to vector<2x8xf32>
    %91 = arith.addf %87, %90 : vector<2x8xf32>
    %c0_33 = arith.constant 0 : index
    %c0_34 = arith.constant 0 : index
    %c0_35 = arith.constant 0 : index
    %92 = vector.load %arg12[%c0_33, %c0_34, %c0_35] : memref<4x2x32xf32, #tpu.memory_space<vmem>>, vector<1x2x32xf32>
    %93 = vector.shape_cast %92 : vector<1x2x32xf32> to vector<2x32xf32>
    %cst_36 = arith.constant dense<0.000000e+00> : vector<2x8xf32>
    %94 = tpu.matmul %93, %84, %cst_36 {dimension_numbers = #tpu.dot_dimension_numbers<[1], [0], [0], [1], [0, 0, 1, 1], [], []>} : vector<2x32xf32>, vector<32x8xf32>, vector<2x8xf32> -> vector<2x8xf32>
    %c0_37 = arith.constant 0 : index
    %c0_38 = arith.constant 0 : index
    %c0_39 = arith.constant 0 : index
    %95 = vector.load %arg14[%c0_37, %c0_38, %c0_39] : memref<4x2x1xf32, #tpu.memory_space<vmem>>, vector<1x2x1xf32>
    %96 = vector.shape_cast %95 : vector<1x2x1xf32> to vector<2x1xf32>
    %97 = vector.broadcast %96 : vector<2x1xf32> to vector<2x8xf32>
    %98 = arith.addf %94, %97 : vector<2x8xf32>
    %99 = arith.negf %98 : vector<2x8xf32>
    %100 = math.exp %99 : vector<2x8xf32>
    %cst_40 = arith.constant 1.000000e+00 : f32
    %101 = vector.broadcast %cst_40 : f32 to vector<2x8xf32>
    %102 = arith.addf %101, %100 : vector<2x8xf32>
    %103 = arith.divf %101, %102 : vector<2x8xf32>
    %cst_41 = arith.constant 1.000000e-03 : f32
    %104 = vector.broadcast %cst_41 : f32 to vector<2x8xf32>
    %105 = arith.addf %103, %104 : vector<2x8xf32>
    %106 = arith.mulf %14, %105 : vector<2x8xf32>
    %107 = arith.addf %106, %91 : vector<2x8xf32>
    %108 = math.log %105 : vector<2x8xf32>
    %cst_42 = arith.constant dense<0.000000e+00> : vector<8xf32>
    %109 = vector.multi_reduction <add>, %108, %cst_42 [0] : vector<2x8xf32> to vector<8xf32>
    %110 = vector.shape_cast %109 : vector<8xf32> to vector<1x8xf32>
    %111 = arith.addf %15, %110 : vector<1x8xf32>
    %c1 = arith.constant 1 : index
    %c0_43 = arith.constant 0 : index
    %c0_44 = arith.constant 0 : index
    %112 = vector.load %arg8[%c1, %c0_43, %c0_44] : memref<4x32x2xf32, #tpu.memory_space<vmem>>, vector<1x32x2xf32>
    %113 = vector.shape_cast %112 : vector<1x32x2xf32> to vector<32x2xf32>
    %114 = vector.extract_strided_slice %113 {offsets = [0, 0], sizes = [32, 1], strides = [1, 1]} : vector<32x2xf32> to vector<32x1xf32>
    %115 = vector.extract_strided_slice %107 {offsets = [0, 0], sizes = [1, 8], strides = [1, 1]} : vector<2x8xf32> to vector<1x8xf32>
    %116 = vector.broadcast %114 : vector<32x1xf32> to vector<32x8xf32>
    %117 = vector.broadcast %115 : vector<1x8xf32> to vector<32x8xf32>
    %118 = arith.mulf %116, %117 : vector<32x8xf32>
    %119 = vector.extract_strided_slice %113 {offsets = [0, 1], sizes = [32, 1], strides = [1, 1]} : vector<32x2xf32> to vector<32x1xf32>
    %120 = vector.extract_strided_slice %107 {offsets = [1, 0], sizes = [1, 8], strides = [1, 1]} : vector<2x8xf32> to vector<1x8xf32>
    %121 = vector.broadcast %119 : vector<32x1xf32> to vector<32x8xf32>
    %122 = vector.broadcast %120 : vector<1x8xf32> to vector<32x8xf32>
    %123 = arith.mulf %121, %122 : vector<32x8xf32>
    %124 = arith.addf %118, %123 : vector<32x8xf32>
    %c1_45 = arith.constant 1 : index
    %c0_46 = arith.constant 0 : index
    %c0_47 = arith.constant 0 : index
    %125 = vector.load %arg9[%c1_45, %c0_46, %c0_47] : memref<4x32x8xf32, #tpu.memory_space<vmem>>, vector<1x32x8xf32>
    %126 = vector.shape_cast %125 : vector<1x32x8xf32> to vector<32x8xf32>
    %127 = vector.extract_strided_slice %126 {offsets = [0, 0], sizes = [32, 1], strides = [1, 1]} : vector<32x8xf32> to vector<32x1xf32>
    %128 = vector.extract_strided_slice %12 {offsets = [0, 0], sizes = [1, 8], strides = [1, 1]} : vector<8x8xf32> to vector<1x8xf32>
    %129 = vector.broadcast %127 : vector<32x1xf32> to vector<32x8xf32>
    %130 = vector.broadcast %128 : vector<1x8xf32> to vector<32x8xf32>
    %131 = arith.mulf %129, %130 : vector<32x8xf32>
    %132 = vector.extract_strided_slice %126 {offsets = [0, 1], sizes = [32, 1], strides = [1, 1]} : vector<32x8xf32> to vector<32x1xf32>
    %133 = vector.extract_strided_slice %12 {offsets = [1, 0], sizes = [1, 8], strides = [1, 1]} : vector<8x8xf32> to vector<1x8xf32>
    %134 = vector.broadcast %132 : vector<32x1xf32> to vector<32x8xf32>
    %135 = vector.broadcast %133 : vector<1x8xf32> to vector<32x8xf32>
    %136 = arith.mulf %134, %135 : vector<32x8xf32>
    %137 = arith.addf %131, %136 : vector<32x8xf32>
    %138 = vector.extract_strided_slice %126 {offsets = [0, 2], sizes = [32, 1], strides = [1, 1]} : vector<32x8xf32> to vector<32x1xf32>
    %139 = vector.extract_strided_slice %12 {offsets = [2, 0], sizes = [1, 8], strides = [1, 1]} : vector<8x8xf32> to vector<1x8xf32>
    %140 = vector.broadcast %138 : vector<32x1xf32> to vector<32x8xf32>
    %141 = vector.broadcast %139 : vector<1x8xf32> to vector<32x8xf32>
    %142 = arith.mulf %140, %141 : vector<32x8xf32>
    %143 = arith.addf %137, %142 : vector<32x8xf32>
    %144 = vector.extract_strided_slice %126 {offsets = [0, 3], sizes = [32, 1], strides = [1, 1]} : vector<32x8xf32> to vector<32x1xf32>
    %145 = vector.extract_strided_slice %12 {offsets = [3, 0], sizes = [1, 8], strides = [1, 1]} : vector<8x8xf32> to vector<1x8xf32>
    %146 = vector.broadcast %144 : vector<32x1xf32> to vector<32x8xf32>
    %147 = vector.broadcast %145 : vector<1x8xf32> to vector<32x8xf32>
    %148 = arith.mulf %146, %147 : vector<32x8xf32>
    %149 = arith.addf %143, %148 : vector<32x8xf32>
    %150 = vector.extract_strided_slice %126 {offsets = [0, 4], sizes = [32, 1], strides = [1, 1]} : vector<32x8xf32> to vector<32x1xf32>
    %151 = vector.extract_strided_slice %12 {offsets = [4, 0], sizes = [1, 8], strides = [1, 1]} : vector<8x8xf32> to vector<1x8xf32>
    %152 = vector.broadcast %150 : vector<32x1xf32> to vector<32x8xf32>
    %153 = vector.broadcast %151 : vector<1x8xf32> to vector<32x8xf32>
    %154 = arith.mulf %152, %153 : vector<32x8xf32>
    %155 = arith.addf %149, %154 : vector<32x8xf32>
    %156 = vector.extract_strided_slice %126 {offsets = [0, 5], sizes = [32, 1], strides = [1, 1]} : vector<32x8xf32> to vector<32x1xf32>
    %157 = vector.extract_strided_slice %12 {offsets = [5, 0], sizes = [1, 8], strides = [1, 1]} : vector<8x8xf32> to vector<1x8xf32>
    %158 = vector.broadcast %156 : vector<32x1xf32> to vector<32x8xf32>
    %159 = vector.broadcast %157 : vector<1x8xf32> to vector<32x8xf32>
    %160 = arith.mulf %158, %159 : vector<32x8xf32>
    %161 = arith.addf %155, %160 : vector<32x8xf32>
    %162 = vector.extract_strided_slice %126 {offsets = [0, 6], sizes = [32, 1], strides = [1, 1]} : vector<32x8xf32> to vector<32x1xf32>
    %163 = vector.extract_strided_slice %12 {offsets = [6, 0], sizes = [1, 8], strides = [1, 1]} : vector<8x8xf32> to vector<1x8xf32>
    %164 = vector.broadcast %162 : vector<32x1xf32> to vector<32x8xf32>
    %165 = vector.broadcast %163 : vector<1x8xf32> to vector<32x8xf32>
    %166 = arith.mulf %164, %165 : vector<32x8xf32>
    %167 = arith.addf %161, %166 : vector<32x8xf32>
    %168 = vector.extract_strided_slice %126 {offsets = [0, 7], sizes = [32, 1], strides = [1, 1]} : vector<32x8xf32> to vector<32x1xf32>
    %169 = vector.extract_strided_slice %12 {offsets = [7, 0], sizes = [1, 8], strides = [1, 1]} : vector<8x8xf32> to vector<1x8xf32>
    %170 = vector.broadcast %168 : vector<32x1xf32> to vector<32x8xf32>
    %171 = vector.broadcast %169 : vector<1x8xf32> to vector<32x8xf32>
    %172 = arith.mulf %170, %171 : vector<32x8xf32>
    %173 = arith.addf %167, %172 : vector<32x8xf32>
    %174 = arith.addf %124, %173 : vector<32x8xf32>
    %c1_48 = arith.constant 1 : index
    %c0_49 = arith.constant 0 : index
    %c0_50 = arith.constant 0 : index
    %175 = vector.load %arg10[%c1_48, %c0_49, %c0_50] : memref<4x32x1xf32, #tpu.memory_space<vmem>>, vector<1x32x1xf32>
    %176 = vector.shape_cast %175 : vector<1x32x1xf32> to vector<32x1xf32>
    %177 = vector.broadcast %176 : vector<32x1xf32> to vector<32x8xf32>
    %178 = arith.addf %174, %177 : vector<32x8xf32>
    %cst_51 = arith.constant 0.000000e+00 : f32
    %179 = vector.broadcast %cst_51 : f32 to vector<32x8xf32>
    %180 = arith.maximumf %178, %179 : vector<32x8xf32>
    %c1_52 = arith.constant 1 : index
    %c0_53 = arith.constant 0 : index
    %c0_54 = arith.constant 0 : index
    %181 = vector.load %arg11[%c1_52, %c0_53, %c0_54] : memref<4x2x32xf32, #tpu.memory_space<vmem>>, vector<1x2x32xf32>
    %182 = vector.shape_cast %181 : vector<1x2x32xf32> to vector<2x32xf32>
    %cst_55 = arith.constant dense<0.000000e+00> : vector<2x8xf32>
    %183 = tpu.matmul %182, %180, %cst_55 {dimension_numbers = #tpu.dot_dimension_numbers<[1], [0], [0], [1], [0, 0, 1, 1], [], []>} : vector<2x32xf32>, vector<32x8xf32>, vector<2x8xf32> -> vector<2x8xf32>
    %c1_56 = arith.constant 1 : index
    %c0_57 = arith.constant 0 : index
    %c0_58 = arith.constant 0 : index
    %184 = vector.load %arg13[%c1_56, %c0_57, %c0_58] : memref<4x2x1xf32, #tpu.memory_space<vmem>>, vector<1x2x1xf32>
    %185 = vector.shape_cast %184 : vector<1x2x1xf32> to vector<2x1xf32>
    %186 = vector.broadcast %185 : vector<2x1xf32> to vector<2x8xf32>
    %187 = arith.addf %183, %186 : vector<2x8xf32>
    %c1_59 = arith.constant 1 : index
    %c0_60 = arith.constant 0 : index
    %c0_61 = arith.constant 0 : index
    %188 = vector.load %arg12[%c1_59, %c0_60, %c0_61] : memref<4x2x32xf32, #tpu.memory_space<vmem>>, vector<1x2x32xf32>
    %189 = vector.shape_cast %188 : vector<1x2x32xf32> to vector<2x32xf32>
    %cst_62 = arith.constant dense<0.000000e+00> : vector<2x8xf32>
    %190 = tpu.matmul %189, %180, %cst_62 {dimension_numbers = #tpu.dot_dimension_numbers<[1], [0], [0], [1], [0, 0, 1, 1], [], []>} : vector<2x32xf32>, vector<32x8xf32>, vector<2x8xf32> -> vector<2x8xf32>
    %c1_63 = arith.constant 1 : index
    %c0_64 = arith.constant 0 : index
    %c0_65 = arith.constant 0 : index
    %191 = vector.load %arg14[%c1_63, %c0_64, %c0_65] : memref<4x2x1xf32, #tpu.memory_space<vmem>>, vector<1x2x1xf32>
    %192 = vector.shape_cast %191 : vector<1x2x1xf32> to vector<2x1xf32>
    %193 = vector.broadcast %192 : vector<2x1xf32> to vector<2x8xf32>
    %194 = arith.addf %190, %193 : vector<2x8xf32>
    %195 = arith.negf %194 : vector<2x8xf32>
    %196 = math.exp %195 : vector<2x8xf32>
    %cst_66 = arith.constant 1.000000e+00 : f32
    %197 = vector.broadcast %cst_66 : f32 to vector<2x8xf32>
    %198 = arith.addf %197, %196 : vector<2x8xf32>
    %199 = arith.divf %197, %198 : vector<2x8xf32>
    %cst_67 = arith.constant 1.000000e-03 : f32
    %200 = vector.broadcast %cst_67 : f32 to vector<2x8xf32>
    %201 = arith.addf %199, %200 : vector<2x8xf32>
    %202 = arith.mulf %13, %201 : vector<2x8xf32>
    %203 = arith.addf %202, %187 : vector<2x8xf32>
    %204 = math.log %201 : vector<2x8xf32>
    %cst_68 = arith.constant dense<0.000000e+00> : vector<8xf32>
    %205 = vector.multi_reduction <add>, %204, %cst_68 [0] : vector<2x8xf32> to vector<8xf32>
    %206 = vector.shape_cast %205 : vector<8xf32> to vector<1x8xf32>
    %207 = arith.addf %111, %206 : vector<1x8xf32>
    %c2 = arith.constant 2 : index
    %c0_69 = arith.constant 0 : index
    %c0_70 = arith.constant 0 : index
    %208 = vector.load %arg8[%c2, %c0_69, %c0_70] : memref<4x32x2xf32, #tpu.memory_space<vmem>>, vector<1x32x2xf32>
    %209 = vector.shape_cast %208 : vector<1x32x2xf32> to vector<32x2xf32>
    %210 = vector.extract_strided_slice %209 {offsets = [0, 0], sizes = [32, 1], strides = [1, 1]} : vector<32x2xf32> to vector<32x1xf32>
    %211 = vector.extract_strided_slice %203 {offsets = [0, 0], sizes = [1, 8], strides = [1, 1]} : vector<2x8xf32> to vector<1x8xf32>
    %212 = vector.broadcast %210 : vector<32x1xf32> to vector<32x8xf32>
    %213 = vector.broadcast %211 : vector<1x8xf32> to vector<32x8xf32>
    %214 = arith.mulf %212, %213 : vector<32x8xf32>
    %215 = vector.extract_strided_slice %209 {offsets = [0, 1], sizes = [32, 1], strides = [1, 1]} : vector<32x2xf32> to vector<32x1xf32>
    %216 = vector.extract_strided_slice %203 {offsets = [1, 0], sizes = [1, 8], strides = [1, 1]} : vector<2x8xf32> to vector<1x8xf32>
    %217 = vector.broadcast %215 : vector<32x1xf32> to vector<32x8xf32>
    %218 = vector.broadcast %216 : vector<1x8xf32> to vector<32x8xf32>
    %219 = arith.mulf %217, %218 : vector<32x8xf32>
    %220 = arith.addf %214, %219 : vector<32x8xf32>
    %c2_71 = arith.constant 2 : index
    %c0_72 = arith.constant 0 : index
    %c0_73 = arith.constant 0 : index
    %221 = vector.load %arg9[%c2_71, %c0_72, %c0_73] : memref<4x32x8xf32, #tpu.memory_space<vmem>>, vector<1x32x8xf32>
    %222 = vector.shape_cast %221 : vector<1x32x8xf32> to vector<32x8xf32>
    %223 = vector.extract_strided_slice %222 {offsets = [0, 0], sizes = [32, 1], strides = [1, 1]} : vector<32x8xf32> to vector<32x1xf32>
    %224 = vector.extract_strided_slice %12 {offsets = [0, 0], sizes = [1, 8], strides = [1, 1]} : vector<8x8xf32> to vector<1x8xf32>
    %225 = vector.broadcast %223 : vector<32x1xf32> to vector<32x8xf32>
    %226 = vector.broadcast %224 : vector<1x8xf32> to vector<32x8xf32>
    %227 = arith.mulf %225, %226 : vector<32x8xf32>
    %228 = vector.extract_strided_slice %222 {offsets = [0, 1], sizes = [32, 1], strides = [1, 1]} : vector<32x8xf32> to vector<32x1xf32>
    %229 = vector.extract_strided_slice %12 {offsets = [1, 0], sizes = [1, 8], strides = [1, 1]} : vector<8x8xf32> to vector<1x8xf32>
    %230 = vector.broadcast %228 : vector<32x1xf32> to vector<32x8xf32>
    %231 = vector.broadcast %229 : vector<1x8xf32> to vector<32x8xf32>
    %232 = arith.mulf %230, %231 : vector<32x8xf32>
    %233 = arith.addf %227, %232 : vector<32x8xf32>
    %234 = vector.extract_strided_slice %222 {offsets = [0, 2], sizes = [32, 1], strides = [1, 1]} : vector<32x8xf32> to vector<32x1xf32>
    %235 = vector.extract_strided_slice %12 {offsets = [2, 0], sizes = [1, 8], strides = [1, 1]} : vector<8x8xf32> to vector<1x8xf32>
    %236 = vector.broadcast %234 : vector<32x1xf32> to vector<32x8xf32>
    %237 = vector.broadcast %235 : vector<1x8xf32> to vector<32x8xf32>
    %238 = arith.mulf %236, %237 : vector<32x8xf32>
    %239 = arith.addf %233, %238 : vector<32x8xf32>
    %240 = vector.extract_strided_slice %222 {offsets = [0, 3], sizes = [32, 1], strides = [1, 1]} : vector<32x8xf32> to vector<32x1xf32>
    %241 = vector.extract_strided_slice %12 {offsets = [3, 0], sizes = [1, 8], strides = [1, 1]} : vector<8x8xf32> to vector<1x8xf32>
    %242 = vector.broadcast %240 : vector<32x1xf32> to vector<32x8xf32>
    %243 = vector.broadcast %241 : vector<1x8xf32> to vector<32x8xf32>
    %244 = arith.mulf %242, %243 : vector<32x8xf32>
    %245 = arith.addf %239, %244 : vector<32x8xf32>
    %246 = vector.extract_strided_slice %222 {offsets = [0, 4], sizes = [32, 1], strides = [1, 1]} : vector<32x8xf32> to vector<32x1xf32>
    %247 = vector.extract_strided_slice %12 {offsets = [4, 0], sizes = [1, 8], strides = [1, 1]} : vector<8x8xf32> to vector<1x8xf32>
    %248 = vector.broadcast %246 : vector<32x1xf32> to vector<32x8xf32>
    %249 = vector.broadcast %247 : vector<1x8xf32> to vector<32x8xf32>
    %250 = arith.mulf %248, %249 : vector<32x8xf32>
    %251 = arith.addf %245, %250 : vector<32x8xf32>
    %252 = vector.extract_strided_slice %222 {offsets = [0, 5], sizes = [32, 1], strides = [1, 1]} : vector<32x8xf32> to vector<32x1xf32>
    %253 = vector.extract_strided_slice %12 {offsets = [5, 0], sizes = [1, 8], strides = [1, 1]} : vector<8x8xf32> to vector<1x8xf32>
    %254 = vector.broadcast %252 : vector<32x1xf32> to vector<32x8xf32>
    %255 = vector.broadcast %253 : vector<1x8xf32> to vector<32x8xf32>
    %256 = arith.mulf %254, %255 : vector<32x8xf32>
    %257 = arith.addf %251, %256 : vector<32x8xf32>
    %258 = vector.extract_strided_slice %222 {offsets = [0, 6], sizes = [32, 1], strides = [1, 1]} : vector<32x8xf32> to vector<32x1xf32>
    %259 = vector.extract_strided_slice %12 {offsets = [6, 0], sizes = [1, 8], strides = [1, 1]} : vector<8x8xf32> to vector<1x8xf32>
    %260 = vector.broadcast %258 : vector<32x1xf32> to vector<32x8xf32>
    %261 = vector.broadcast %259 : vector<1x8xf32> to vector<32x8xf32>
    %262 = arith.mulf %260, %261 : vector<32x8xf32>
    %263 = arith.addf %257, %262 : vector<32x8xf32>
    %264 = vector.extract_strided_slice %222 {offsets = [0, 7], sizes = [32, 1], strides = [1, 1]} : vector<32x8xf32> to vector<32x1xf32>
    %265 = vector.extract_strided_slice %12 {offsets = [7, 0], sizes = [1, 8], strides = [1, 1]} : vector<8x8xf32> to vector<1x8xf32>
    %266 = vector.broadcast %264 : vector<32x1xf32> to vector<32x8xf32>
    %267 = vector.broadcast %265 : vector<1x8xf32> to vector<32x8xf32>
    %268 = arith.mulf %266, %267 : vector<32x8xf32>
    %269 = arith.addf %263, %268 : vector<32x8xf32>
    %270 = arith.addf %220, %269 : vector<32x8xf32>
    %c2_74 = arith.constant 2 : index
    %c0_75 = arith.constant 0 : index
    %c0_76 = arith.constant 0 : index
    %271 = vector.load %arg10[%c2_74, %c0_75, %c0_76] : memref<4x32x1xf32, #tpu.memory_space<vmem>>, vector<1x32x1xf32>
    %272 = vector.shape_cast %271 : vector<1x32x1xf32> to vector<32x1xf32>
    %273 = vector.broadcast %272 : vector<32x1xf32> to vector<32x8xf32>
    %274 = arith.addf %270, %273 : vector<32x8xf32>
    %cst_77 = arith.constant 0.000000e+00 : f32
    %275 = vector.broadcast %cst_77 : f32 to vector<32x8xf32>
    %276 = arith.maximumf %274, %275 : vector<32x8xf32>
    %c2_78 = arith.constant 2 : index
    %c0_79 = arith.constant 0 : index
    %c0_80 = arith.constant 0 : index
    %277 = vector.load %arg11[%c2_78, %c0_79, %c0_80] : memref<4x2x32xf32, #tpu.memory_space<vmem>>, vector<1x2x32xf32>
    %278 = vector.shape_cast %277 : vector<1x2x32xf32> to vector<2x32xf32>
    %cst_81 = arith.constant dense<0.000000e+00> : vector<2x8xf32>
    %279 = tpu.matmul %278, %276, %cst_81 {dimension_numbers = #tpu.dot_dimension_numbers<[1], [0], [0], [1], [0, 0, 1, 1], [], []>} : vector<2x32xf32>, vector<32x8xf32>, vector<2x8xf32> -> vector<2x8xf32>
    %c2_82 = arith.constant 2 : index
    %c0_83 = arith.constant 0 : index
    %c0_84 = arith.constant 0 : index
    %280 = vector.load %arg13[%c2_82, %c0_83, %c0_84] : memref<4x2x1xf32, #tpu.memory_space<vmem>>, vector<1x2x1xf32>
    %281 = vector.shape_cast %280 : vector<1x2x1xf32> to vector<2x1xf32>
    %282 = vector.broadcast %281 : vector<2x1xf32> to vector<2x8xf32>
    %283 = arith.addf %279, %282 : vector<2x8xf32>
    %c2_85 = arith.constant 2 : index
    %c0_86 = arith.constant 0 : index
    %c0_87 = arith.constant 0 : index
    %284 = vector.load %arg12[%c2_85, %c0_86, %c0_87] : memref<4x2x32xf32, #tpu.memory_space<vmem>>, vector<1x2x32xf32>
    %285 = vector.shape_cast %284 : vector<1x2x32xf32> to vector<2x32xf32>
    %cst_88 = arith.constant dense<0.000000e+00> : vector<2x8xf32>
    %286 = tpu.matmul %285, %276, %cst_88 {dimension_numbers = #tpu.dot_dimension_numbers<[1], [0], [0], [1], [0, 0, 1, 1], [], []>} : vector<2x32xf32>, vector<32x8xf32>, vector<2x8xf32> -> vector<2x8xf32>
    %c2_89 = arith.constant 2 : index
    %c0_90 = arith.constant 0 : index
    %c0_91 = arith.constant 0 : index
    %287 = vector.load %arg14[%c2_89, %c0_90, %c0_91] : memref<4x2x1xf32, #tpu.memory_space<vmem>>, vector<1x2x1xf32>
    %288 = vector.shape_cast %287 : vector<1x2x1xf32> to vector<2x1xf32>
    %289 = vector.broadcast %288 : vector<2x1xf32> to vector<2x8xf32>
    %290 = arith.addf %286, %289 : vector<2x8xf32>
    %291 = arith.negf %290 : vector<2x8xf32>
    %292 = math.exp %291 : vector<2x8xf32>
    %cst_92 = arith.constant 1.000000e+00 : f32
    %293 = vector.broadcast %cst_92 : f32 to vector<2x8xf32>
    %294 = arith.addf %293, %292 : vector<2x8xf32>
    %295 = arith.divf %293, %294 : vector<2x8xf32>
    %cst_93 = arith.constant 1.000000e-03 : f32
    %296 = vector.broadcast %cst_93 : f32 to vector<2x8xf32>
    %297 = arith.addf %295, %296 : vector<2x8xf32>
    %298 = arith.mulf %107, %297 : vector<2x8xf32>
    %299 = arith.addf %298, %283 : vector<2x8xf32>
    %300 = math.log %297 : vector<2x8xf32>
    %cst_94 = arith.constant dense<0.000000e+00> : vector<8xf32>
    %301 = vector.multi_reduction <add>, %300, %cst_94 [0] : vector<2x8xf32> to vector<8xf32>
    %302 = vector.shape_cast %301 : vector<8xf32> to vector<1x8xf32>
    %303 = arith.addf %207, %302 : vector<1x8xf32>
    %c3 = arith.constant 3 : index
    %c0_95 = arith.constant 0 : index
    %c0_96 = arith.constant 0 : index
    %304 = vector.load %arg8[%c3, %c0_95, %c0_96] : memref<4x32x2xf32, #tpu.memory_space<vmem>>, vector<1x32x2xf32>
    %305 = vector.shape_cast %304 : vector<1x32x2xf32> to vector<32x2xf32>
    %306 = vector.extract_strided_slice %305 {offsets = [0, 0], sizes = [32, 1], strides = [1, 1]} : vector<32x2xf32> to vector<32x1xf32>
    %307 = vector.extract_strided_slice %299 {offsets = [0, 0], sizes = [1, 8], strides = [1, 1]} : vector<2x8xf32> to vector<1x8xf32>
    %308 = vector.broadcast %306 : vector<32x1xf32> to vector<32x8xf32>
    %309 = vector.broadcast %307 : vector<1x8xf32> to vector<32x8xf32>
    %310 = arith.mulf %308, %309 : vector<32x8xf32>
    %311 = vector.extract_strided_slice %305 {offsets = [0, 1], sizes = [32, 1], strides = [1, 1]} : vector<32x2xf32> to vector<32x1xf32>
    %312 = vector.extract_strided_slice %299 {offsets = [1, 0], sizes = [1, 8], strides = [1, 1]} : vector<2x8xf32> to vector<1x8xf32>
    %313 = vector.broadcast %311 : vector<32x1xf32> to vector<32x8xf32>
    %314 = vector.broadcast %312 : vector<1x8xf32> to vector<32x8xf32>
    %315 = arith.mulf %313, %314 : vector<32x8xf32>
    %316 = arith.addf %310, %315 : vector<32x8xf32>
    %c3_97 = arith.constant 3 : index
    %c0_98 = arith.constant 0 : index
    %c0_99 = arith.constant 0 : index
    %317 = vector.load %arg9[%c3_97, %c0_98, %c0_99] : memref<4x32x8xf32, #tpu.memory_space<vmem>>, vector<1x32x8xf32>
    %318 = vector.shape_cast %317 : vector<1x32x8xf32> to vector<32x8xf32>
    %319 = vector.extract_strided_slice %318 {offsets = [0, 0], sizes = [32, 1], strides = [1, 1]} : vector<32x8xf32> to vector<32x1xf32>
    %320 = vector.extract_strided_slice %12 {offsets = [0, 0], sizes = [1, 8], strides = [1, 1]} : vector<8x8xf32> to vector<1x8xf32>
    %321 = vector.broadcast %319 : vector<32x1xf32> to vector<32x8xf32>
    %322 = vector.broadcast %320 : vector<1x8xf32> to vector<32x8xf32>
    %323 = arith.mulf %321, %322 : vector<32x8xf32>
    %324 = vector.extract_strided_slice %318 {offsets = [0, 1], sizes = [32, 1], strides = [1, 1]} : vector<32x8xf32> to vector<32x1xf32>
    %325 = vector.extract_strided_slice %12 {offsets = [1, 0], sizes = [1, 8], strides = [1, 1]} : vector<8x8xf32> to vector<1x8xf32>
    %326 = vector.broadcast %324 : vector<32x1xf32> to vector<32x8xf32>
    %327 = vector.broadcast %325 : vector<1x8xf32> to vector<32x8xf32>
    %328 = arith.mulf %326, %327 : vector<32x8xf32>
    %329 = arith.addf %323, %328 : vector<32x8xf32>
    %330 = vector.extract_strided_slice %318 {offsets = [0, 2], sizes = [32, 1], strides = [1, 1]} : vector<32x8xf32> to vector<32x1xf32>
    %331 = vector.extract_strided_slice %12 {offsets = [2, 0], sizes = [1, 8], strides = [1, 1]} : vector<8x8xf32> to vector<1x8xf32>
    %332 = vector.broadcast %330 : vector<32x1xf32> to vector<32x8xf32>
    %333 = vector.broadcast %331 : vector<1x8xf32> to vector<32x8xf32>
    %334 = arith.mulf %332, %333 : vector<32x8xf32>
    %335 = arith.addf %329, %334 : vector<32x8xf32>
    %336 = vector.extract_strided_slice %318 {offsets = [0, 3], sizes = [32, 1], strides = [1, 1]} : vector<32x8xf32> to vector<32x1xf32>
    %337 = vector.extract_strided_slice %12 {offsets = [3, 0], sizes = [1, 8], strides = [1, 1]} : vector<8x8xf32> to vector<1x8xf32>
    %338 = vector.broadcast %336 : vector<32x1xf32> to vector<32x8xf32>
    %339 = vector.broadcast %337 : vector<1x8xf32> to vector<32x8xf32>
    %340 = arith.mulf %338, %339 : vector<32x8xf32>
    %341 = arith.addf %335, %340 : vector<32x8xf32>
    %342 = vector.extract_strided_slice %318 {offsets = [0, 4], sizes = [32, 1], strides = [1, 1]} : vector<32x8xf32> to vector<32x1xf32>
    %343 = vector.extract_strided_slice %12 {offsets = [4, 0], sizes = [1, 8], strides = [1, 1]} : vector<8x8xf32> to vector<1x8xf32>
    %344 = vector.broadcast %342 : vector<32x1xf32> to vector<32x8xf32>
    %345 = vector.broadcast %343 : vector<1x8xf32> to vector<32x8xf32>
    %346 = arith.mulf %344, %345 : vector<32x8xf32>
    %347 = arith.addf %341, %346 : vector<32x8xf32>
    %348 = vector.extract_strided_slice %318 {offsets = [0, 5], sizes = [32, 1], strides = [1, 1]} : vector<32x8xf32> to vector<32x1xf32>
    %349 = vector.extract_strided_slice %12 {offsets = [5, 0], sizes = [1, 8], strides = [1, 1]} : vector<8x8xf32> to vector<1x8xf32>
    %350 = vector.broadcast %348 : vector<32x1xf32> to vector<32x8xf32>
    %351 = vector.broadcast %349 : vector<1x8xf32> to vector<32x8xf32>
    %352 = arith.mulf %350, %351 : vector<32x8xf32>
    %353 = arith.addf %347, %352 : vector<32x8xf32>
    %354 = vector.extract_strided_slice %318 {offsets = [0, 6], sizes = [32, 1], strides = [1, 1]} : vector<32x8xf32> to vector<32x1xf32>
    %355 = vector.extract_strided_slice %12 {offsets = [6, 0], sizes = [1, 8], strides = [1, 1]} : vector<8x8xf32> to vector<1x8xf32>
    %356 = vector.broadcast %354 : vector<32x1xf32> to vector<32x8xf32>
    %357 = vector.broadcast %355 : vector<1x8xf32> to vector<32x8xf32>
    %358 = arith.mulf %356, %357 : vector<32x8xf32>
    %359 = arith.addf %353, %358 : vector<32x8xf32>
    %360 = vector.extract_strided_slice %318 {offsets = [0, 7], sizes = [32, 1], strides = [1, 1]} : vector<32x8xf32> to vector<32x1xf32>
    %361 = vector.extract_strided_slice %12 {offsets = [7, 0], sizes = [1, 8], strides = [1, 1]} : vector<8x8xf32> to vector<1x8xf32>
    %362 = vector.broadcast %360 : vector<32x1xf32> to vector<32x8xf32>
    %363 = vector.broadcast %361 : vector<1x8xf32> to vector<32x8xf32>
    %364 = arith.mulf %362, %363 : vector<32x8xf32>
    %365 = arith.addf %359, %364 : vector<32x8xf32>
    %366 = arith.addf %316, %365 : vector<32x8xf32>
    %c3_100 = arith.constant 3 : index
    %c0_101 = arith.constant 0 : index
    %c0_102 = arith.constant 0 : index
    %367 = vector.load %arg10[%c3_100, %c0_101, %c0_102] : memref<4x32x1xf32, #tpu.memory_space<vmem>>, vector<1x32x1xf32>
    %368 = vector.shape_cast %367 : vector<1x32x1xf32> to vector<32x1xf32>
    %369 = vector.broadcast %368 : vector<32x1xf32> to vector<32x8xf32>
    %370 = arith.addf %366, %369 : vector<32x8xf32>
    %cst_103 = arith.constant 0.000000e+00 : f32
    %371 = vector.broadcast %cst_103 : f32 to vector<32x8xf32>
    %372 = arith.maximumf %370, %371 : vector<32x8xf32>
    %c3_104 = arith.constant 3 : index
    %c0_105 = arith.constant 0 : index
    %c0_106 = arith.constant 0 : index
    %373 = vector.load %arg11[%c3_104, %c0_105, %c0_106] : memref<4x2x32xf32, #tpu.memory_space<vmem>>, vector<1x2x32xf32>
    %374 = vector.shape_cast %373 : vector<1x2x32xf32> to vector<2x32xf32>
    %cst_107 = arith.constant dense<0.000000e+00> : vector<2x8xf32>
    %375 = tpu.matmul %374, %372, %cst_107 {dimension_numbers = #tpu.dot_dimension_numbers<[1], [0], [0], [1], [0, 0, 1, 1], [], []>} : vector<2x32xf32>, vector<32x8xf32>, vector<2x8xf32> -> vector<2x8xf32>
    %c3_108 = arith.constant 3 : index
    %c0_109 = arith.constant 0 : index
    %c0_110 = arith.constant 0 : index
    %376 = vector.load %arg13[%c3_108, %c0_109, %c0_110] : memref<4x2x1xf32, #tpu.memory_space<vmem>>, vector<1x2x1xf32>
    %377 = vector.shape_cast %376 : vector<1x2x1xf32> to vector<2x1xf32>
    %378 = vector.broadcast %377 : vector<2x1xf32> to vector<2x8xf32>
    %379 = arith.addf %375, %378 : vector<2x8xf32>
    %c3_111 = arith.constant 3 : index
    %c0_112 = arith.constant 0 : index
    %c0_113 = arith.constant 0 : index
    %380 = vector.load %arg12[%c3_111, %c0_112, %c0_113] : memref<4x2x32xf32, #tpu.memory_space<vmem>>, vector<1x2x32xf32>
    %381 = vector.shape_cast %380 : vector<1x2x32xf32> to vector<2x32xf32>
    %cst_114 = arith.constant dense<0.000000e+00> : vector<2x8xf32>
    %382 = tpu.matmul %381, %372, %cst_114 {dimension_numbers = #tpu.dot_dimension_numbers<[1], [0], [0], [1], [0, 0, 1, 1], [], []>} : vector<2x32xf32>, vector<32x8xf32>, vector<2x8xf32> -> vector<2x8xf32>
    %c3_115 = arith.constant 3 : index
    %c0_116 = arith.constant 0 : index
    %c0_117 = arith.constant 0 : index
    %383 = vector.load %arg14[%c3_115, %c0_116, %c0_117] : memref<4x2x1xf32, #tpu.memory_space<vmem>>, vector<1x2x1xf32>
    %384 = vector.shape_cast %383 : vector<1x2x1xf32> to vector<2x1xf32>
    %385 = vector.broadcast %384 : vector<2x1xf32> to vector<2x8xf32>
    %386 = arith.addf %382, %385 : vector<2x8xf32>
    %387 = arith.negf %386 : vector<2x8xf32>
    %388 = math.exp %387 : vector<2x8xf32>
    %cst_118 = arith.constant 1.000000e+00 : f32
    %389 = vector.broadcast %cst_118 : f32 to vector<2x8xf32>
    %390 = arith.addf %389, %388 : vector<2x8xf32>
    %391 = arith.divf %389, %390 : vector<2x8xf32>
    %cst_119 = arith.constant 1.000000e-03 : f32
    %392 = vector.broadcast %cst_119 : f32 to vector<2x8xf32>
    %393 = arith.addf %391, %392 : vector<2x8xf32>
    %394 = arith.mulf %203, %393 : vector<2x8xf32>
    %395 = arith.addf %394, %379 : vector<2x8xf32>
    %396 = math.log %393 : vector<2x8xf32>
    %cst_120 = arith.constant dense<0.000000e+00> : vector<8xf32>
    %397 = vector.multi_reduction <add>, %396, %cst_120 [0] : vector<2x8xf32> to vector<8xf32>
    %398 = vector.shape_cast %397 : vector<8xf32> to vector<1x8xf32>
    %399 = arith.addf %303, %398 : vector<1x8xf32>
    %400 = tpu.concatenate %395, %299, %399 in 0 : vector<2x8xf32>, vector<2x8xf32>, vector<1x8xf32> -> vector<5x8xf32>
    %c0_121 = arith.constant 0 : index
    %c0_122 = arith.constant 0 : index
    %401 = vector.load %arg15[%c0_121, %c0_122] : memref<5x8xf32, #tpu.memory_space<vmem>>, vector<5x8xf32>
    tpu.vector_store %arg15[%c0_121, %c0_122], %400 {strides = array<i32>} : memref<5x8xf32, #tpu.memory_space<vmem>>, vector<5x8xf32>,
    return
  }
  func.func @transform_0(%arg0: i32) -> (i32, i32) {
    %c0_i32 = arith.constant 0 : i32
    %c0_i32_0 = arith.constant 0 : i32
    return %c0_i32, %arg0 : i32, i32
  }
  func.func @transform_1(%arg0: i32) -> (i32, i32) {
    %c0_i32 = arith.constant 0 : i32
    %c0_i32_0 = arith.constant 0 : i32
    return %c0_i32, %arg0 : i32, i32
  }
  func.func @transform_2(%arg0: i32) -> (i32, i32) {
    %c0_i32 = arith.constant 0 : i32
    %c0_i32_0 = arith.constant 0 : i32
    return %c0_i32, %arg0 : i32, i32
  }
  func.func @transform_3(%arg0: i32) -> (i32, i32) {
    %c0_i32 = arith.constant 0 : i32
    %c0_i32_0 = arith.constant 0 : i32
    %c0_i32_1 = arith.constant 0 : i32
    return %c0_i32, %c0_i32_0 : i32, i32
  }
  func.func @transform_4(%arg0: i32) -> (i32, i32) {
    %c0_i32 = arith.constant 0 : i32
    %c0_i32_0 = arith.constant 0 : i32
    %c0_i32_1 = arith.constant 0 : i32
    return %c0_i32, %c0_i32_0 : i32, i32
  }
  func.func @transform_5(%arg0: i32) -> (i32, i32) {
    %c0_i32 = arith.constant 0 : i32
    %c0_i32_0 = arith.constant 0 : i32
    %c0_i32_1 = arith.constant 0 : i32
    return %c0_i32, %c0_i32_0 : i32, i32
  }
  func.func @transform_6(%arg0: i32) -> (i32, i32) {
    %c0_i32 = arith.constant 0 : i32
    %c0_i32_0 = arith.constant 0 : i32
    %c0_i32_1 = arith.constant 0 : i32
    return %c0_i32, %c0_i32_0 : i32, i32
  }
  func.func @transform_7(%arg0: i32) -> (i32, i32, i32) {
    %c0_i32 = arith.constant 0 : i32
    %c0_i32_0 = arith.constant 0 : i32
    %c0_i32_1 = arith.constant 0 : i32
    %c0_i32_2 = arith.constant 0 : i32
    return %c0_i32, %c0_i32_0, %c0_i32_1 : i32, i32, i32
  }
  func.func @transform_8(%arg0: i32) -> (i32, i32, i32) {
    %c0_i32 = arith.constant 0 : i32
    %c0_i32_0 = arith.constant 0 : i32
    %c0_i32_1 = arith.constant 0 : i32
    %c0_i32_2 = arith.constant 0 : i32
    return %c0_i32, %c0_i32_0, %c0_i32_1 : i32, i32, i32
  }
  func.func @transform_9(%arg0: i32) -> (i32, i32, i32) {
    %c0_i32 = arith.constant 0 : i32
    %c0_i32_0 = arith.constant 0 : i32
    %c0_i32_1 = arith.constant 0 : i32
    %c0_i32_2 = arith.constant 0 : i32
    return %c0_i32, %c0_i32_0, %c0_i32_1 : i32, i32, i32
  }
  func.func @transform_10(%arg0: i32) -> (i32, i32, i32) {
    %c0_i32 = arith.constant 0 : i32
    %c0_i32_0 = arith.constant 0 : i32
    %c0_i32_1 = arith.constant 0 : i32
    %c0_i32_2 = arith.constant 0 : i32
    return %c0_i32, %c0_i32_0, %c0_i32_1 : i32, i32, i32
  }
  func.func @transform_11(%arg0: i32) -> (i32, i32, i32) {
    %c0_i32 = arith.constant 0 : i32
    %c0_i32_0 = arith.constant 0 : i32
    %c0_i32_1 = arith.constant 0 : i32
    %c0_i32_2 = arith.constant 0 : i32
    return %c0_i32, %c0_i32_0, %c0_i32_1 : i32, i32, i32
  }
  func.func @transform_12(%arg0: i32) -> (i32, i32, i32) {
    %c0_i32 = arith.constant 0 : i32
    %c0_i32_0 = arith.constant 0 : i32
    %c0_i32_1 = arith.constant 0 : i32
    %c0_i32_2 = arith.constant 0 : i32
    return %c0_i32, %c0_i32_0, %c0_i32_1 : i32, i32, i32
  }
  func.func @transform_13(%arg0: i32) -> (i32, i32, i32) {
    %c0_i32 = arith.constant 0 : i32
    %c0_i32_0 = arith.constant 0 : i32
    %c0_i32_1 = arith.constant 0 : i32
    %c0_i32_2 = arith.constant 0 : i32
    return %c0_i32, %c0_i32_0, %c0_i32_1 : i32, i32, i32
  }
  func.func @transform_14(%arg0: i32) -> (i32, i32) {
    %c0_i32 = arith.constant 0 : i32
    %c0_i32_0 = arith.constant 0 : i32
    return %c0_i32, %arg0 : i32, i32
  }
}

</mosaic_0001>

<llo_original>
// kernel: tpu_custom_call.1
$region0: #{tpu_custom_call.1}
  #allocation0 [shape = 'u32[]', space=smem, size = 0x4, offset = 0x4, fixed_abs, tag = 'smem constant byte address 0x4 - core index']
  #allocation1 [shape = 'u32[144,128]{1,0:T(1,128)}', space=vmem, size = 0x12000, scoped, tag = 'internal scratch']
  %s0 = inlined_call_operand.vmem [shape: f32[16,8], index: 0, kind: input, shape index: {}]
  %s1 = inlined_call_operand.vmem [shape: f32[2,8], index: 1, kind: input, shape index: {}]
  %s2 = inlined_call_operand.vmem [shape: f32[2,8], index: 2, kind: input, shape index: {}]
  %s3 = inlined_call_operand.vmem [shape: f32[32,16], index: 3, kind: input, shape index: {}]
  %s4 = inlined_call_operand.vmem [shape: f32[32,1], index: 4, kind: input, shape index: {}]
  %s5 = inlined_call_operand.vmem [shape: f32[8,32], index: 5, kind: input, shape index: {}]
  %s6 = inlined_call_operand.vmem [shape: f32[8,1], index: 6, kind: input, shape index: {}]
  %s7 = inlined_call_operand.vmem [shape: f32[4,32,2], index: 7, kind: input, shape index: {}]
  %s8 = inlined_call_operand.vmem [shape: f32[4,32,8], index: 8, kind: input, shape index: {}]
  %s9 = inlined_call_operand.vmem [shape: f32[4,32,1], index: 9, kind: input, shape index: {}]
  %s10 = inlined_call_operand.vmem [shape: f32[4,2,32], index: 10, kind: input, shape index: {}]
  %s11 = inlined_call_operand.vmem [shape: f32[4,2,32], index: 11, kind: input, shape index: {}]
  %s12 = inlined_call_operand.vmem [shape: f32[4,2,1], index: 12, kind: input, shape index: {}]
  %s13 = inlined_call_operand.vmem [shape: f32[4,2,1], index: 13, kind: input, shape index: {}]
  %s14 = inlined_call_operand.hbm [shape: f32[5,8], index: 14, kind: output, shape index: {}]
  %s15 = sld [smem:[#allocation0]]
  $region66: #{tpu_custom_call.1} parent=0
    _
  %s17 = ssub.s32 1, %s15
  %s18 = scalar_select 0, %s17, %s15
  $region1: #{tpu_custom_call.1} parent=0
    #allocation2 [shape = 'u8[4096]{0}', space=vmem, size = 0x1000, scoped, tag = 'output window, operand 0, single buffered']
    #allocation3 [shape = 's32[1]{0}', space=sflag, size = 0x4, scoped, tag = 'scoped memory for tpu_custom_call.1']
    %19 = vsyncpa [#allocation3], 0
    // Predicated region
    $region2: #{tpu_custom_call.1} parent=1 // pred_check
      _
    $region3: #{tpu_custom_call.1} parent=1 // pred_check_branch
      %21 = sbr.rel (0) target = $region5
    $region4: #{tpu_custom_call.1} parent=1 // pred_region
      _
    $region5: #{tpu_custom_call.1} parent=1 // pred_fallthru
      _
    // Predicated region
    $region6: #{tpu_custom_call.1} parent=1 // pred_check
      _
    $region7: #{tpu_custom_call.1} parent=1 // pred_check_branch
      %23 = sbr.rel (0) target = $region9
    $region8: #{tpu_custom_call.1} parent=1 // pred_region
      _
    $region9: #{tpu_custom_call.1} parent=1 // pred_fallthru
      _
    // Predicated region
    $region10: #{tpu_custom_call.1} parent=1 // pred_check
      _
    $region11: #{tpu_custom_call.1} parent=1 // pred_check_branch
      %25 = sbr.rel (0) target = $region13
    $region12: #{tpu_custom_call.1} parent=1 // pred_region
      _
    $region13: #{tpu_custom_call.1} parent=1 // pred_fallthru
      _
    // Predicated region
    $region14: #{tpu_custom_call.1} parent=1 // pred_check
      _
    $region15: #{tpu_custom_call.1} parent=1 // pred_check_branch
      %27 = sbr.rel (0) target = $region17
    $region16: #{tpu_custom_call.1} parent=1 // pred_region
      _
    $region17: #{tpu_custom_call.1} parent=1 // pred_fallthru
      _
    // Predicated region
    $region18: #{tpu_custom_call.1} parent=1 // pred_check
      _
    $region19: #{tpu_custom_call.1} parent=1 // pred_check_branch
      %29 = sbr.rel (0) target = $region21
    $region20: #{tpu_custom_call.1} parent=1 // pred_region
      _
    $region21: #{tpu_custom_call.1} parent=1 // pred_fallthru
      _
    // Predicated region
    $region22: #{tpu_custom_call.1} parent=1 // pred_check
      _
    $region23: #{tpu_custom_call.1} parent=1 // pred_check_branch
      %31 = sbr.rel (0) target = $region25
    $region24: #{tpu_custom_call.1} parent=1 // pred_region
      _
    $region25: #{tpu_custom_call.1} parent=1 // pred_fallthru
      _
    // Predicated region
    $region26: #{tpu_custom_call.1} parent=1 // pred_check
      _
    $region27: #{tpu_custom_call.1} parent=1 // pred_check_branch
      %33 = sbr.rel (0) target = $region29
    $region28: #{tpu_custom_call.1} parent=1 // pred_region
      _
    $region29: #{tpu_custom_call.1} parent=1 // pred_fallthru
      _
    // Predicated region
    $region30: #{tpu_custom_call.1} parent=1 // pred_check
      _
    $region31: #{tpu_custom_call.1} parent=1 // pred_check_branch
      %35 = sbr.rel (0) target = $region33
    $region32: #{tpu_custom_call.1} parent=1 // pred_region
      _
    $region33: #{tpu_custom_call.1} parent=1 // pred_fallthru
      _
    // Predicated region
    $region34: #{tpu_custom_call.1} parent=1 // pred_check
      _
    $region35: #{tpu_custom_call.1} parent=1 // pred_check_branch
      %37 = sbr.rel (0) target = $region37
    $region36: #{tpu_custom_call.1} parent=1 // pred_region
      _
    $region37: #{tpu_custom_call.1} parent=1 // pred_fallthru
      _
    // Predicated region
    $region38: #{tpu_custom_call.1} parent=1 // pred_check
      _
    $region39: #{tpu_custom_call.1} parent=1 // pred_check_branch
      %39 = sbr.rel (0) target = $region41
    $region40: #{tpu_custom_call.1} parent=1 // pred_region
      _
    $region41: #{tpu_custom_call.1} parent=1 // pred_fallthru
      _
    // Predicated region
    $region42: #{tpu_custom_call.1} parent=1 // pred_check
      _
    $region43: #{tpu_custom_call.1} parent=1 // pred_check_branch
      %41 = sbr.rel (0) target = $region45
    $region44: #{tpu_custom_call.1} parent=1 // pred_region
      _
    $region45: #{tpu_custom_call.1} parent=1 // pred_fallthru
      _
    // Predicated region
    $region46: #{tpu_custom_call.1} parent=1 // pred_check
      _
    $region47: #{tpu_custom_call.1} parent=1 // pred_check_branch
      %43 = sbr.rel (0) target = $region49
    $region48: #{tpu_custom_call.1} parent=1 // pred_region
      _
    $region49: #{tpu_custom_call.1} parent=1 // pred_fallthru
      _
    // Predicated region
    $region50: #{tpu_custom_call.1} parent=1 // pred_check
      _
    $region51: #{tpu_custom_call.1} parent=1 // pred_check_branch
      %45 = sbr.rel (0) target = $region53
    $region52: #{tpu_custom_call.1} parent=1 // pred_region
      _
    $region53: #{tpu_custom_call.1} parent=1 // pred_fallthru
      _
    // Predicated region
    $region54: #{tpu_custom_call.1} parent=1 // pred_check
      _
    $region55: #{tpu_custom_call.1} parent=1 // pred_check_branch
      %47 = sbr.rel (0) target = $region57
    $region56: #{tpu_custom_call.1} parent=1 // pred_region
      _
    $region57: #{tpu_custom_call.1} parent=1 // pred_fallthru
      _
    %v48 = vld [vmem:[%s3] sm:$0xff]
    %v49 = vld [vmem:[%s3 + $0x8] sm:$0xff]
    %v50 = vld [vmem:[%s3 + $0x10] sm:$0xff]
    %v51 = vld [vmem:[%s3 + $0x18] sm:$0xff]
    %v52 = vld [vmem:[%s0] sm:$0xff]
    %v53 = vld [vmem:[%s0 + $0x8] sm:$0xff]
    %v54 = vld [vmem:[%s4] sm:$0xff]
    %v55 = vld [vmem:[%s4 + $0x8] sm:$0xff]
    %v56 = vld [vmem:[%s4 + $0x10] sm:$0xff]
    %v57 = vld [vmem:[%s4 + $0x18] sm:$0xff]
    %59 = vset.pattern.permute.xlu0 0
    %60 = vperm.xlu0 %59, %v54
    %v61 = vpop.permute.xlu0 %60
    %64 = vset.pattern.permute.xlu0 0
    %65 = vperm.xlu0 %64, %v55
    %v66 = vpop.permute.xlu0 %65
    %69 = vset.pattern.permute.xlu0 0
    %70 = vperm.xlu0 %69, %v56
    %v71 = vpop.permute.xlu0 %70
    %74 = vset.pattern.permute.xlu0 0
    %75 = vperm.xlu0 %74, %v57
    %v76 = vpop.permute.xlu0 %75
    %vm78 = vcmask 130048
    %v80 = vsel %vm78, %v48, 0
    %v83 = vsel %vm78, %v49, 0
    %v86 = vsel %vm78, %v50, 0
    %v89 = vsel %vm78, %v51, 0
    %91 = vmatprep.subr.mxu0 0.0
    %92 = vmatpush1.msra.mxu0 %v52
    %93 = vmatprep.subr.mxu0 0.0
    %94 = vmatpush1.msra.mxu0 %v53
    %95 = vmatprep.subr.mxu0 0.0
    %96 = vmatpush1.msra.mxu0 0.0
    %97 = vmatprep.subr.mxu0 0.0
    %98 = vmatpush1.msra.mxu0 0.0
    %99 = vmatprep.subr.mxu0 0.0
    %100 = vmatpush1.msra.mxu0 0.0
    %101 = vmatprep.subr.mxu0 0.0
    %102 = vmatpush1.msra.mxu0 0.0
    %103 = vmatprep.subr.mxu0 0.0
    %104 = vmatpush1.msra.mxu0 0.0
    %105 = vmatprep.subr.mxu0 0.0
    %106 = vmatpush1.msra.mxu0 0.0
    %107 = vmatprep.subr.mxu0 0.0
    %108 = vmatpush1.msra.mxu0 0.0
    %109 = vmatprep.subr.mxu0 0.0
    %110 = vmatpush1.msra.mxu0 0.0
    %111 = vmatprep.subr.mxu0 0.0
    %112 = vmatpush1.msra.mxu0 0.0
    %113 = vmatprep.subr.mxu0 0.0
    %114 = vmatpush1.msra.mxu0 0.0
    %115 = vmatprep.subr.mxu0 0.0
    %116 = vmatpush1.msra.mxu0 0.0
    %117 = vmatprep.subr.mxu0 0.0
    %118 = vmatpush1.msra.mxu0 0.0
    %119 = vmatprep.subr.mxu0 0.0
    %120 = vmatpush1.msra.mxu0 0.0
    %121 = vmatprep.subr.mxu0 0.0
    %122 = vmatpush1.msra.mxu0 0.0
    %123 = vmatprep.subr.mxu0 0.0
    %124 = vmatpush1.msra.mxu0 0.0
    %125 = vmatprep.subr.mxu0 0.0
    %126 = vmatpush1.msra.mxu0 0.0
    %127 = vmatprep.subr.mxu0 0.0
    %128 = vmatpush1.msra.mxu0 0.0
    %129 = vmatprep.subr.mxu0 0.0
    %130 = vmatpush1.msra.mxu0 0.0
    %131 = vmatprep.subr.mxu0 0.0
    %132 = vmatpush1.msra.mxu0 0.0
    %133 = vmatprep.subr.mxu0 0.0
    %134 = vmatpush1.msra.mxu0 0.0
    %135 = vmatprep.subr.mxu0 0.0
    %136 = vmatpush1.msra.mxu0 0.0
    %137 = vmatprep.subr.mxu0 0.0
    %138 = vmatpush1.msra.mxu0 0.0
    %139 = vmatprep.subr.mxu0 0.0
    %140 = vmatpush1.msra.mxu0 0.0
    %141 = vmatprep.subr.mxu0 0.0
    %142 = vmatpush1.msra.mxu0 0.0
    %143 = vmatprep.subr.mxu0 0.0
    %144 = vmatpush1.msra.mxu0 0.0
    %145 = vmatprep.subr.mxu0 0.0
    %146 = vmatpush1.msra.mxu0 0.0
    %147 = vmatprep.subr.mxu0 0.0
    %148 = vmatpush1.msra.mxu0 0.0
    %149 = vmatprep.subr.mxu0 0.0
    %150 = vmatpush1.msra.mxu0 0.0
    %151 = vmatprep.subr.mxu0 0.0
    %152 = vmatpush1.msra.mxu0 0.0
    %153 = vmatprep.subr.mxu0 0.0
    %154 = vmatpush1.msra.mxu0 0.0
    %155 = vmatprep.mubr.f32.mxu0 0.0
    %156 = vmatmul.mubr.f32.gmra.mrb[0].mxu0 %v80
    %v157 = vpop.f32.mrb[0].mxu0
    %v158 = vadd.f32 %v61, %v157
    %v159 = vpop.f32.mrb[0].mxu0
    %160 = vmatprep.mubr.f32.mxu0 0.0
    %161 = vmatmul.mubr.f32.gmra.mrb[0].mxu0 %v83
    %v162 = vpop.f32.mrb[0].mxu0
    %v163 = vadd.f32 %v66, %v162
    %v164 = vpop.f32.mrb[0].mxu0
    %165 = vmatprep.mubr.f32.mxu0 0.0
    %166 = vmatmul.mubr.f32.gmra.mrb[0].mxu0 %v86
    %v167 = vpop.f32.mrb[0].mxu0
    %v168 = vadd.f32 %v71, %v167
    %v169 = vpop.f32.mrb[0].mxu0
    %170 = vmatprep.mubr.f32.mxu0 0.0
    %171 = vmatmul.mubr.f32.gmra.mrb[0].mxu0 %v89
    %v172 = vpop.f32.mrb[0].mxu0
    %v173 = vadd.f32 %v76, %v172
    %v174 = vpop.f32.mrb[0].mxu0
    %175 = vdwg.mxu0
    %v176 = vmax.f32 %v158, 0.0
    %v177 = vmax.f32 %v163, 0.0
    %v178 = vmax.f32 %v168, 0.0
    %v179 = vmax.f32 %v173, 0.0
    %v180 = vld [vmem:[%s5] sm:$0xff]
    %v181 = vld [vmem:[%s6] sm:$0xff]
    %183 = vset.pattern.permute.xlu0 0
    %184 = vperm.xlu0 %183, %v181
    %v185 = vpop.permute.xlu0 %184
    %vm187 = vcmask 261120
    %v189 = vsel %vm187, %v180, 0
    %191 = vmatprep.subr.mxu0 0.0
    %192 = vmatpush1.msra.mxu0 %v176
    %193 = vmatprep.subr.mxu0 0.0
    %194 = vmatpush1.msra.mxu0 %v177
    %195 = vmatprep.subr.mxu0 0.0
    %196 = vmatpush1.msra.mxu0 %v178
    %197 = vmatprep.subr.mxu0 0.0
    %198 = vmatpush1.msra.mxu0 %v179
    %199 = vmatprep.subr.mxu0 0.0
    %200 = vmatpush1.msra.mxu0 0.0
    %201 = vmatprep.subr.mxu0 0.0
    %202 = vmatpush1.msra.mxu0 0.0
    %203 = vmatprep.subr.mxu0 0.0
    %204 = vmatpush1.msra.mxu0 0.0
    %205 = vmatprep.subr.mxu0 0.0
    %206 = vmatpush1.msra.mxu0 0.0
    %207 = vmatprep.subr.mxu0 0.0
    %208 = vmatpush1.msra.mxu0 0.0
    %209 = vmatprep.subr.mxu0 0.0
    %210 = vmatpush1.msra.mxu0 0.0
    %211 = vmatprep.subr.mxu0 0.0
    %212 = vmatpush1.msra.mxu0 0.0
    %213 = vmatprep.subr.mxu0 0.0
    %214 = vmatpush1.msra.mxu0 0.0
    %215 = vmatprep.subr.mxu0 0.0
    %216 = vmatpush1.msra.mxu0 0.0
    %217 = vmatprep.subr.mxu0 0.0
    %218 = vmatpush1.msra.mxu0 0.0
    %219 = vmatprep.subr.mxu0 0.0
    %220 = vmatpush1.msra.mxu0 0.0
    %221 = vmatprep.subr.mxu0 0.0
    %222 = vmatpush1.msra.mxu0 0.0
    %223 = vmatprep.subr.mxu0 0.0
    %224 = vmatpush1.msra.mxu0 0.0
    %225 = vmatprep.subr.mxu0 0.0
    %226 = vmatpush1.msra.mxu0 0.0
    %227 = vmatprep.subr.mxu0 0.0
    %228 = vmatpush1.msra.mxu0 0.0
    %229 = vmatprep.subr.mxu0 0.0
    %230 = vmatpush1.msra.mxu0 0.0
    %231 = vmatprep.subr.mxu0 0.0
    %232 = vmatpush1.msra.mxu0 0.0
    %233 = vmatprep.subr.mxu0 0.0
    %234 = vmatpush1.msra.mxu0 0.0
    %235 = vmatprep.subr.mxu0 0.0
    %236 = vmatpush1.msra.mxu0 0.0
    %237 = vmatprep.subr.mxu0 0.0
    %238 = vmatpush1.msra.mxu0 0.0
    %239 = vmatprep.subr.mxu0 0.0
    %240 = vmatpush1.msra.mxu0 0.0
    %241 = vmatprep.subr.mxu0 0.0
    %242 = vmatpush1.msra.mxu0 0.0
    %243 = vmatprep.subr.mxu0 0.0
    %244 = vmatpush1.msra.mxu0 0.0
    %245 = vmatprep.subr.mxu0 0.0
    %246 = vmatpush1.msra.mxu0 0.0
    %247 = vmatprep.subr.mxu0 0.0
    %248 = vmatpush1.msra.mxu0 0.0
    %249 = vmatprep.subr.mxu0 0.0
    %250 = vmatpush1.msra.mxu0 0.0
    %251 = vmatprep.subr.mxu0 0.0
    %252 = vmatpush1.msra.mxu0 0.0
    %253 = vmatprep.subr.mxu0 0.0
    %254 = vmatpush1.msra.mxu0 0.0
    %255 = vmatprep.mubr.f32.mxu0 0.0
    %256 = vmatmul.mubr.f32.gmra.mrb[0].mxu0 %v189
    %v257 = vpop.f32.mrb[0].mxu0
    %v258 = vadd.f32 %v185, %v257
    %v259 = vpop.f32.mrb[0].mxu0
    %260 = vdwg.mxu0
    %v261 = vld [vmem:[%s1] sm:$0x3]
    %v262 = vld [vmem:[%s2] sm:$0x3]
    %v263 = vld [vmem:[%s7] sm:$0xff]
    %v264 = vld [vmem:[%s7 + $0x8] sm:$0xff]
    %v265 = vld [vmem:[%s7 + $0x10] sm:$0xff]
    %v266 = vld [vmem:[%s7 + $0x18] sm:$0xff]
    %268 = vset.pattern.permute.xlu0 0
    %269 = vperm.xlu0 %268, %v263
    %v270 = vpop.permute.xlu0 %269
    %273 = vset.pattern.permute.xlu0 0
    %274 = vperm.xlu0 %273, %v264
    %v275 = vpop.permute.xlu0 %274
    %278 = vset.pattern.permute.xlu0 0
    %279 = vperm.xlu0 %278, %v265
    %v280 = vpop.permute.xlu0 %279
    %283 = vset.pattern.permute.xlu0 0
    %284 = vperm.xlu0 %283, %v266
    %v285 = vpop.permute.xlu0 %284
    %v287 = vlaneseq
    %v288 = vshrl.u32 %v287, 7
    %v289 = vsub.s32 0, %v288
    %v290 = vrot.slane %v261, %v289
    %v291 = vmul.f32 %v270, %v290
    %v292 = vmul.f32 %v275, %v290
    %v293 = vmul.f32 %v280, %v290
    %v294 = vmul.f32 %v285, %v290
    %295 = vset.pattern.permute.xlu0 1
    %296 = vperm.xlu0 %295, %v263
    %v297 = vpop.permute.xlu0 %296
    %299 = vset.pattern.permute.xlu0 1
    %300 = vperm.xlu0 %299, %v264
    %v301 = vpop.permute.xlu0 %300
    %303 = vset.pattern.permute.xlu0 1
    %304 = vperm.xlu0 %303, %v265
    %v305 = vpop.permute.xlu0 %304
    %307 = vset.pattern.permute.xlu0 1
    %308 = vperm.xlu0 %307, %v266
    %v309 = vpop.permute.xlu0 %308
    %v311 = vlaneseq
    %v312 = vshrl.u32 %v311, 7
    %v313 = vsub.s32 1, %v312
    %v314 = vrot.slane %v261, %v313
    %v315 = vmul.f32 %v297, %v314
    %v316 = vmul.f32 %v301, %v314
    %v317 = vmul.f32 %v305, %v314
    %v318 = vmul.f32 %v309, %v314
    %v319 = vadd.f32 %v291, %v315
    %v320 = vadd.f32 %v292, %v316
    %v321 = vadd.f32 %v293, %v317
    %v322 = vadd.f32 %v294, %v318
    %v323 = vld [vmem:[%s8] sm:$0xff]
    %v324 = vld [vmem:[%s8 + $0x8] sm:$0xff]
    %v325 = vld [vmem:[%s8 + $0x10] sm:$0xff]
    %v326 = vld [vmem:[%s8 + $0x18] sm:$0xff]
    %328 = vset.pattern.permute.xlu0 0
    %329 = vperm.xlu0 %328, %v323
    %v330 = vpop.permute.xlu0 %329
    %333 = vset.pattern.permute.xlu0 0
    %334 = vperm.xlu0 %333, %v324
    %v335 = vpop.permute.xlu0 %334
    %338 = vset.pattern.permute.xlu0 0
    %339 = vperm.xlu0 %338, %v325
    %v340 = vpop.permute.xlu0 %339
    %343 = vset.pattern.permute.xlu0 0
    %344 = vperm.xlu0 %343, %v326
    %v345 = vpop.permute.xlu0 %344
    %v347 = vlaneseq
    %v348 = vshrl.u32 %v347, 7
    %v349 = vsub.s32 0, %v348
    %v350 = vrot.slane %v258, %v349
    %v351 = vmul.f32 %v330, %v350
    %v352 = vmul.f32 %v335, %v350
    %v353 = vmul.f32 %v340, %v350
    %v354 = vmul.f32 %v345, %v350
    %355 = vset.pattern.permute.xlu0 1
    %356 = vperm.xlu0 %355, %v323
    %v357 = vpop.permute.xlu0 %356
    %359 = vset.pattern.permute.xlu0 1
    %360 = vperm.xlu0 %359, %v324
    %v361 = vpop.permute.xlu0 %360
    %363 = vset.pattern.permute.xlu0 1
    %364 = vperm.xlu0 %363, %v325
    %v365 = vpop.permute.xlu0 %364
    %367 = vset.pattern.permute.xlu0 1
    %368 = vperm.xlu0 %367, %v326
    %v369 = vpop.permute.xlu0 %368
    %v371 = vlaneseq
    %v372 = vshrl.u32 %v371, 7
    %v373 = vsub.s32 1, %v372
    %v374 = vrot.slane %v258, %v373
    %v375 = vmul.f32 %v357, %v374
    %v376 = vmul.f32 %v361, %v374
    %v377 = vmul.f32 %v365, %v374
    %v378 = vmul.f32 %v369, %v374
    %v379 = vadd.f32 %v351, %v375
    %v380 = vadd.f32 %v352, %v376
    %v381 = vadd.f32 %v353, %v377
    %v382 = vadd.f32 %v354, %v378
    %383 = vset.pattern.permute.xlu0 2
    %384 = vperm.xlu0 %383, %v323
    %v385 = vpop.permute.xlu0 %384
    %387 = vset.pattern.permute.xlu0 2
    %388 = vperm.xlu0 %387, %v324
    %v389 = vpop.permute.xlu0 %388
    %391 = vset.pattern.permute.xlu0 2
    %392 = vperm.xlu0 %391, %v325
    %v393 = vpop.permute.xlu0 %392
    %395 = vset.pattern.permute.xlu0 2
    %396 = vperm.xlu0 %395, %v326
    %v397 = vpop.permute.xlu0 %396
    %v399 = vlaneseq
    %v400 = vshrl.u32 %v399, 7
    %v401 = vsub.s32 2, %v400
    %v402 = vrot.slane %v258, %v401
    %v403 = vmul.f32 %v385, %v402
    %v404 = vmul.f32 %v389, %v402
    %v405 = vmul.f32 %v393, %v402
    %v406 = vmul.f32 %v397, %v402
    %v407 = vadd.f32 %v379, %v403
    %v408 = vadd.f32 %v380, %v404
    %v409 = vadd.f32 %v381, %v405
    %v410 = vadd.f32 %v382, %v406
    %411 = vset.pattern.permute.xlu0 3
    %412 = vperm.xlu0 %411, %v323
    %v413 = vpop.permute.xlu0 %412
    %415 = vset.pattern.permute.xlu0 3
    %416 = vperm.xlu0 %415, %v324
    %v417 = vpop.permute.xlu0 %416
    %419 = vset.pattern.permute.xlu0 3
    %420 = vperm.xlu0 %419, %v325
    %v421 = vpop.permute.xlu0 %420
    %423 = vset.pattern.permute.xlu0 3
    %424 = vperm.xlu0 %423, %v326
    %v425 = vpop.permute.xlu0 %424
    %v427 = vlaneseq
    %v428 = vshrl.u32 %v427, 7
    %v429 = vsub.s32 3, %v428
    %v430 = vrot.slane %v258, %v429
    %v431 = vmul.f32 %v413, %v430
    %v432 = vmul.f32 %v417, %v430
    %v433 = vmul.f32 %v421, %v430
    %v434 = vmul.f32 %v425, %v430
    %v435 = vadd.f32 %v407, %v431
    %v436 = vadd.f32 %v408, %v432
    %v437 = vadd.f32 %v409, %v433
    %v438 = vadd.f32 %v410, %v434
    %439 = vset.pattern.permute.xlu0 4
    %440 = vperm.xlu0 %439, %v323
    %v441 = vpop.permute.xlu0 %440
    %443 = vset.pattern.permute.xlu0 4
    %444 = vperm.xlu0 %443, %v324
    %v445 = vpop.permute.xlu0 %444
    %447 = vset.pattern.permute.xlu0 4
    %448 = vperm.xlu0 %447, %v325
    %v449 = vpop.permute.xlu0 %448
    %451 = vset.pattern.permute.xlu0 4
    %452 = vperm.xlu0 %451, %v326
    %v453 = vpop.permute.xlu0 %452
    %v455 = vlaneseq
    %v456 = vshrl.u32 %v455, 7
    %v457 = vsub.s32 4, %v456
    %v458 = vrot.slane %v258, %v457
    %v459 = vmul.f32 %v441, %v458
    %v460 = vmul.f32 %v445, %v458
    %v461 = vmul.f32 %v449, %v458
    %v462 = vmul.f32 %v453, %v458
    %v463 = vadd.f32 %v435, %v459
    %v464 = vadd.f32 %v436, %v460
    %v465 = vadd.f32 %v437, %v461
    %v466 = vadd.f32 %v438, %v462
    %467 = vset.pattern.permute.xlu0 5
    %468 = vperm.xlu0 %467, %v323
    %v469 = vpop.permute.xlu0 %468
    %471 = vset.pattern.permute.xlu0 5
    %472 = vperm.xlu0 %471, %v324
    %v473 = vpop.permute.xlu0 %472
    %475 = vset.pattern.permute.xlu0 5
    %476 = vperm.xlu0 %475, %v325
    %v477 = vpop.permute.xlu0 %476
    %479 = vset.pattern.permute.xlu0 5
    %480 = vperm.xlu0 %479, %v326
    %v481 = vpop.permute.xlu0 %480
    %v483 = vlaneseq
    %v484 = vshrl.u32 %v483, 7
    %v485 = vsub.s32 5, %v484
    %v486 = vrot.slane %v258, %v485
    %v487 = vmul.f32 %v469, %v486
    %v488 = vmul.f32 %v473, %v486
    %v489 = vmul.f32 %v477, %v486
    %v490 = vmul.f32 %v481, %v486
    %v491 = vadd.f32 %v463, %v487
    %v492 = vadd.f32 %v464, %v488
    %v493 = vadd.f32 %v465, %v489
    %v494 = vadd.f32 %v466, %v490
    %495 = vset.pattern.permute.xlu0 6
    %496 = vperm.xlu0 %495, %v323
    %v497 = vpop.permute.xlu0 %496
    %499 = vset.pattern.permute.xlu0 6
    %500 = vperm.xlu0 %499, %v324
    %v501 = vpop.permute.xlu0 %500
    %503 = vset.pattern.permute.xlu0 6
    %504 = vperm.xlu0 %503, %v325
    %v505 = vpop.permute.xlu0 %504
    %507 = vset.pattern.permute.xlu0 6
    %508 = vperm.xlu0 %507, %v326
    %v509 = vpop.permute.xlu0 %508
    %v511 = vlaneseq
    %v512 = vshrl.u32 %v511, 7
    %v513 = vsub.s32 6, %v512
    %v514 = vrot.slane %v258, %v513
    %v515 = vmul.f32 %v497, %v514
    %v516 = vmul.f32 %v501, %v514
    %v517 = vmul.f32 %v505, %v514
    %v518 = vmul.f32 %v509, %v514
    %v519 = vadd.f32 %v491, %v515
    %v520 = vadd.f32 %v492, %v516
    %v521 = vadd.f32 %v493, %v517
    %v522 = vadd.f32 %v494, %v518
    %523 = vset.pattern.permute.xlu0 7
    %524 = vperm.xlu0 %523, %v323
    %v525 = vpop.permute.xlu0 %524
    %527 = vset.pattern.permute.xlu0 7
    %528 = vperm.xlu0 %527, %v324
    %v529 = vpop.permute.xlu0 %528
    %531 = vset.pattern.permute.xlu0 7
    %532 = vperm.xlu0 %531, %v325
    %v533 = vpop.permute.xlu0 %532
    %535 = vset.pattern.permute.xlu0 7
    %536 = vperm.xlu0 %535, %v326
    %v537 = vpop.permute.xlu0 %536
    %v539 = vlaneseq
    %v540 = vshrl.u32 %v539, 7
    %v541 = vsub.s32 7, %v540
    %v542 = vrot.slane %v258, %v541
    %v543 = vmul.f32 %v525, %v542
    %v544 = vmul.f32 %v529, %v542
    %v545 = vmul.f32 %v533, %v542
    %v546 = vmul.f32 %v537, %v542
    %v547 = vadd.f32 %v519, %v543
    %v548 = vadd.f32 %v520, %v544
    %v549 = vadd.f32 %v521, %v545
    %v550 = vadd.f32 %v522, %v546
    %v551 = vadd.f32 %v319, %v547
    %v552 = vadd.f32 %v320, %v548
    %v553 = vadd.f32 %v321, %v549
    %v554 = vadd.f32 %v322, %v550
    %v555 = vld [vmem:[%s9] sm:$0xff]
    %v556 = vld [vmem:[%s9 + $0x8] sm:$0xff]
    %v557 = vld [vmem:[%s9 + $0x10] sm:$0xff]
    %v558 = vld [vmem:[%s9 + $0x18] sm:$0xff]
    %560 = vset.pattern.permute.xlu0 0
    %561 = vperm.xlu0 %560, %v555
    %v562 = vpop.permute.xlu0 %561
    %565 = vset.pattern.permute.xlu0 0
    %566 = vperm.xlu0 %565, %v556
    %v567 = vpop.permute.xlu0 %566
    %570 = vset.pattern.permute.xlu0 0
    %571 = vperm.xlu0 %570, %v557
    %v572 = vpop.permute.xlu0 %571
    %575 = vset.pattern.permute.xlu0 0
    %576 = vperm.xlu0 %575, %v558
    %v577 = vpop.permute.xlu0 %576
    %v579 = vadd.f32 %v551, %v562
    %v580 = vadd.f32 %v552, %v567
    %v581 = vadd.f32 %v553, %v572
    %v582 = vadd.f32 %v554, %v577
    %v583 = vmax.f32 %v579, 0.0
    %v584 = vmax.f32 %v580, 0.0
    %v585 = vmax.f32 %v581, 0.0
    %v586 = vmax.f32 %v582, 0.0
    %v587 = vld [vmem:[%s10] sm:$0x3]
    %v588 = vld [vmem:[%s12] sm:$0x3]
    %590 = vset.pattern.permute.xlu0 0
    %591 = vperm.xlu0 %590, %v588
    %v592 = vpop.permute.xlu0 %591
    %v595 = vsel %vm187, %v587, 0
    %597 = vmatprep.subr.mxu0 0.0
    %598 = vmatpush1.msra.mxu0 %v583
    %599 = vmatprep.subr.mxu0 0.0
    %600 = vmatpush1.msra.mxu0 %v584
    %601 = vmatprep.subr.mxu0 0.0
    %602 = vmatpush1.msra.mxu0 %v585
    %603 = vmatprep.subr.mxu0 0.0
    %604 = vmatpush1.msra.mxu0 %v586
    %605 = vmatprep.subr.mxu0 0.0
    %606 = vmatpush1.msra.mxu0 0.0
    %607 = vmatprep.subr.mxu0 0.0
    %608 = vmatpush1.msra.mxu0 0.0
    %609 = vmatprep.subr.mxu0 0.0
    %610 = vmatpush1.msra.mxu0 0.0
    %611 = vmatprep.subr.mxu0 0.0
    %612 = vmatpush1.msra.mxu0 0.0
    %613 = vmatprep.subr.mxu0 0.0
    %614 = vmatpush1.msra.mxu0 0.0
    %615 = vmatprep.subr.mxu0 0.0
    %616 = vmatpush1.msra.mxu0 0.0
    %617 = vmatprep.subr.mxu0 0.0
    %618 = vmatpush1.msra.mxu0 0.0
    %619 = vmatprep.subr.mxu0 0.0
    %620 = vmatpush1.msra.mxu0 0.0
    %621 = vmatprep.subr.mxu0 0.0
    %622 = vmatpush1.msra.mxu0 0.0
    %623 = vmatprep.subr.mxu0 0.0
    %624 = vmatpush1.msra.mxu0 0.0
    %625 = vmatprep.subr.mxu0 0.0
    %626 = vmatpush1.msra.mxu0 0.0
    %627 = vmatprep.subr.mxu0 0.0
    %628 = vmatpush1.msra.mxu0 0.0
    %629 = vmatprep.subr.mxu0 0.0
    %630 = vmatpush1.msra.mxu0 0.0
    %631 = vmatprep.subr.mxu0 0.0
    %632 = vmatpush1.msra.mxu0 0.0
    %633 = vmatprep.subr.mxu0 0.0
    %634 = vmatpush1.msra.mxu0 0.0
    %635 = vmatprep.subr.mxu0 0.0
    %636 = vmatpush1.msra.mxu0 0.0
    %637 = vmatprep.subr.mxu0 0.0
    %638 = vmatpush1.msra.mxu0 0.0
    %639 = vmatprep.subr.mxu0 0.0
    %640 = vmatpush1.msra.mxu0 0.0
    %641 = vmatprep.subr.mxu0 0.0
    %642 = vmatpush1.msra.mxu0 0.0
    %643 = vmatprep.subr.mxu0 0.0
    %644 = vmatpush1.msra.mxu0 0.0
    %645 = vmatprep.subr.mxu0 0.0
    %646 = vmatpush1.msra.mxu0 0.0
    %647 = vmatprep.subr.mxu0 0.0
    %648 = vmatpush1.msra.mxu0 0.0
    %649 = vmatprep.subr.mxu0 0.0
    %650 = vmatpush1.msra.mxu0 0.0
    %651 = vmatprep.subr.mxu0 0.0
    %652 = vmatpush1.msra.mxu0 0.0
    %653 = vmatprep.subr.mxu0 0.0
    %654 = vmatpush1.msra.mxu0 0.0
    %655 = vmatprep.subr.mxu0 0.0
    %656 = vmatpush1.msra.mxu0 0.0
    %657 = vmatprep.subr.mxu0 0.0
    %658 = vmatpush1.msra.mxu0 0.0
    %659 = vmatprep.subr.mxu0 0.0
    %660 = vmatpush1.msra.mxu0 0.0
    %661 = vmatprep.mubr.f32.mxu0 0.0
    %662 = vmatmul.mubr.f32.gmra.mrb[0].mxu0 %v595
    %v663 = vpop.f32.mrb[0].mxu0
    %v664 = vadd.f32 %v592, %v663
    %v665 = vpop.f32.mrb[0].mxu0
    %666 = vdwg.mxu0
    %v667 = vld [vmem:[%s11] sm:$0x3]
    %v668 = vld [vmem:[%s13] sm:$0x3]
    %670 = vset.pattern.permute.xlu0 0
    %671 = vperm.xlu0 %670, %v668
    %v672 = vpop.permute.xlu0 %671
    %v675 = vsel %vm187, %v667, 0
    %677 = vmatprep.subr.mxu0 0.0
    %678 = vmatpush1.msra.mxu0 %v583
    %679 = vmatprep.subr.mxu0 0.0
    %680 = vmatpush1.msra.mxu0 %v584
    %681 = vmatprep.subr.mxu0 0.0
    %682 = vmatpush1.msra.mxu0 %v585
    %683 = vmatprep.subr.mxu0 0.0
    %684 = vmatpush1.msra.mxu0 %v586
    %685 = vmatprep.subr.mxu0 0.0
    %686 = vmatpush1.msra.mxu0 0.0
    %687 = vmatprep.subr.mxu0 0.0
    %688 = vmatpush1.msra.mxu0 0.0
    %689 = vmatprep.subr.mxu0 0.0
    %690 = vmatpush1.msra.mxu0 0.0
    %691 = vmatprep.subr.mxu0 0.0
    %692 = vmatpush1.msra.mxu0 0.0
    %693 = vmatprep.subr.mxu0 0.0
    %694 = vmatpush1.msra.mxu0 0.0
    %695 = vmatprep.subr.mxu0 0.0
    %696 = vmatpush1.msra.mxu0 0.0
    %697 = vmatprep.subr.mxu0 0.0
    %698 = vmatpush1.msra.mxu0 0.0
    %699 = vmatprep.subr.mxu0 0.0
    %700 = vmatpush1.msra.mxu0 0.0
    %701 = vmatprep.subr.mxu0 0.0
    %702 = vmatpush1.msra.mxu0 0.0
    %703 = vmatprep.subr.mxu0 0.0
    %704 = vmatpush1.msra.mxu0 0.0
    %705 = vmatprep.subr.mxu0 0.0
    %706 = vmatpush1.msra.mxu0 0.0
    %707 = vmatprep.subr.mxu0 0.0
    %708 = vmatpush1.msra.mxu0 0.0
    %709 = vmatprep.subr.mxu0 0.0
    %710 = vmatpush1.msra.mxu0 0.0
    %711 = vmatprep.subr.mxu0 0.0
    %712 = vmatpush1.msra.mxu0 0.0
    %713 = vmatprep.subr.mxu0 0.0
    %714 = vmatpush1.msra.mxu0 0.0
    %715 = vmatprep.subr.mxu0 0.0
    %716 = vmatpush1.msra.mxu0 0.0
    %717 = vmatprep.subr.mxu0 0.0
    %718 = vmatpush1.msra.mxu0 0.0
    %719 = vmatprep.subr.mxu0 0.0
    %720 = vmatpush1.msra.mxu0 0.0
    %721 = vmatprep.subr.mxu0 0.0
    %722 = vmatpush1.msra.mxu0 0.0
    %723 = vmatprep.subr.mxu0 0.0
    %724 = vmatpush1.msra.mxu0 0.0
    %725 = vmatprep.subr.mxu0 0.0
    %726 = vmatpush1.msra.mxu0 0.0
    %727 = vmatprep.subr.mxu0 0.0
    %728 = vmatpush1.msra.mxu0 0.0
    %729 = vmatprep.subr.mxu0 0.0
    %730 = vmatpush1.msra.mxu0 0.0
    %731 = vmatprep.subr.mxu0 0.0
    %732 = vmatpush1.msra.mxu0 0.0
    %733 = vmatprep.subr.mxu0 0.0
    %734 = vmatpush1.msra.mxu0 0.0
    %735 = vmatprep.subr.mxu0 0.0
    %736 = vmatpush1.msra.mxu0 0.0
    %737 = vmatprep.subr.mxu0 0.0
    %738 = vmatpush1.msra.mxu0 0.0
    %739 = vmatprep.subr.mxu0 0.0
    %740 = vmatpush1.msra.mxu0 0.0
    %741 = vmatprep.mubr.f32.mxu0 0.0
    %742 = vmatmul.mubr.f32.gmra.mrb[0].mxu0 %v675
    %v743 = vpop.f32.mrb[0].mxu0
    %v744 = vadd.f32 %v672, %v743
    %v745 = vpop.f32.mrb[0].mxu0
    %746 = vdwg.mxu0
    %v747 = vxor.u32 %v744, 2147483648
    %v748 = vmul.f32 %v747, 1.442695
    %v749 = vpow.pop %v748
    %v750 = vadd.f32 %v749, 1.0
    %v751 = vrcp.pop %v750
    %v752 = vmul.f32 1.0, %v751
    %v753 = vadd.f32 %v752, 0.001
    %v754 = vmul.f32 %v262, %v753
    %v755 = vadd.f32 %v754, %v664
    %v756 = vlog2.pop %v753
    %v757 = vmul.f32 %v756, 0.6931472
    %vm758 = vcmask 58368
    %v759 = vsel %vm758, %v757, 0.0
    %v760 = vrot.slane %v759, 4
    %v761 = vadd.f32 %v759, %v760
    %v762 = vrot.slane %v761, 2
    %v763 = vadd.f32 %v761, %v762
    %v764 = vrot.slane %v763, 1
    %v765 = vadd.f32 %v763, %v764
    %v766 = vadd.f32 %v765, 0.0
    %s767 = scalar_lea.vmem %s7, 32
    %v768 = vld [vmem:[%s767] sm:$0xff]
    %v769 = vld [vmem:[%s767 + $0x8] sm:$0xff]
    %v770 = vld [vmem:[%s767 + $0x10] sm:$0xff]
    %v771 = vld [vmem:[%s767 + $0x18] sm:$0xff]
    %773 = vset.pattern.permute.xlu0 0
    %774 = vperm.xlu0 %773, %v768
    %v775 = vpop.permute.xlu0 %774
    %778 = vset.pattern.permute.xlu0 0
    %779 = vperm.xlu0 %778, %v769
    %v780 = vpop.permute.xlu0 %779
    %783 = vset.pattern.permute.xlu0 0
    %784 = vperm.xlu0 %783, %v770
    %v785 = vpop.permute.xlu0 %784
    %788 = vset.pattern.permute.xlu0 0
    %789 = vperm.xlu0 %788, %v771
    %v790 = vpop.permute.xlu0 %789
    %v792 = vlaneseq
    %v793 = vshrl.u32 %v792, 7
    %v794 = vsub.s32 0, %v793
    %v795 = vrot.slane %v755, %v794
    %v796 = vmul.f32 %v775, %v795
    %v797 = vmul.f32 %v780, %v795
    %v798 = vmul.f32 %v785, %v795
    %v799 = vmul.f32 %v790, %v795
    %800 = vset.pattern.permute.xlu0 1
    %801 = vperm.xlu0 %800, %v768
    %v802 = vpop.permute.xlu0 %801
    %804 = vset.pattern.permute.xlu0 1
    %805 = vperm.xlu0 %804, %v769
    %v806 = vpop.permute.xlu0 %805
    %808 = vset.pattern.permute.xlu0 1
    %809 = vperm.xlu0 %808, %v770
    %v810 = vpop.permute.xlu0 %809
    %812 = vset.pattern.permute.xlu0 1
    %813 = vperm.xlu0 %812, %v771
    %v814 = vpop.permute.xlu0 %813
    %v816 = vlaneseq
    %v817 = vshrl.u32 %v816, 7
    %v818 = vsub.s32 1, %v817
    %v819 = vrot.slane %v755, %v818
    %v820 = vmul.f32 %v802, %v819
    %v821 = vmul.f32 %v806, %v819
    %v822 = vmul.f32 %v810, %v819
    %v823 = vmul.f32 %v814, %v819
    %v824 = vadd.f32 %v796, %v820
    %v825 = vadd.f32 %v797, %v821
    %v826 = vadd.f32 %v798, %v822
    %v827 = vadd.f32 %v799, %v823
    %s828 = scalar_lea.vmem %s8, 32
    %v829 = vld [vmem:[%s828] sm:$0xff]
    %v830 = vld [vmem:[%s828 + $0x8] sm:$0xff]
    %v831 = vld [vmem:[%s828 + $0x10] sm:$0xff]
    %v832 = vld [vmem:[%s828 + $0x18] sm:$0xff]
    %834 = vset.pattern.permute.xlu0 0
    %835 = vperm.xlu0 %834, %v829
    %v836 = vpop.permute.xlu0 %835
    %839 = vset.pattern.permute.xlu0 0
    %840 = vperm.xlu0 %839, %v830
    %v841 = vpop.permute.xlu0 %840
    %844 = vset.pattern.permute.xlu0 0
    %845 = vperm.xlu0 %844, %v831
    %v846 = vpop.permute.xlu0 %845
    %849 = vset.pattern.permute.xlu0 0
    %850 = vperm.xlu0 %849, %v832
    %v851 = vpop.permute.xlu0 %850
    %v853 = vmul.f32 %v836, %v350
    %v854 = vmul.f32 %v841, %v350
    %v855 = vmul.f32 %v846, %v350
    %v856 = vmul.f32 %v851, %v350
    %857 = vset.pattern.permute.xlu0 1
    %858 = vperm.xlu0 %857, %v829
    %v859 = vpop.permute.xlu0 %858
    %861 = vset.pattern.permute.xlu0 1
    %862 = vperm.xlu0 %861, %v830
    %v863 = vpop.permute.xlu0 %862
    %865 = vset.pattern.permute.xlu0 1
    %866 = vperm.xlu0 %865, %v831
    %v867 = vpop.permute.xlu0 %866
    %869 = vset.pattern.permute.xlu0 1
    %870 = vperm.xlu0 %869, %v832
    %v871 = vpop.permute.xlu0 %870
    %v873 = vmul.f32 %v859, %v374
    %v874 = vmul.f32 %v863, %v374
    %v875 = vmul.f32 %v867, %v374
    %v876 = vmul.f32 %v871, %v374
    %v877 = vadd.f32 %v853, %v873
    %v878 = vadd.f32 %v854, %v874
    %v879 = vadd.f32 %v855, %v875
    %v880 = vadd.f32 %v856, %v876
    %881 = vset.pattern.permute.xlu0 2
    %882 = vperm.xlu0 %881, %v829
    %v883 = vpop.permute.xlu0 %882
    %885 = vset.pattern.permute.xlu0 2
    %886 = vperm.xlu0 %885, %v830
    %v887 = vpop.permute.xlu0 %886
    %889 = vset.pattern.permute.xlu0 2
    %890 = vperm.xlu0 %889, %v831
    %v891 = vpop.permute.xlu0 %890
    %893 = vset.pattern.permute.xlu0 2
    %894 = vperm.xlu0 %893, %v832
    %v895 = vpop.permute.xlu0 %894
    %v897 = vmul.f32 %v883, %v402
    %v898 = vmul.f32 %v887, %v402
    %v899 = vmul.f32 %v891, %v402
    %v900 = vmul.f32 %v895, %v402
    %v901 = vadd.f32 %v877, %v897
    %v902 = vadd.f32 %v878, %v898
    %v903 = vadd.f32 %v879, %v899
    %v904 = vadd.f32 %v880, %v900
    %905 = vset.pattern.permute.xlu0 3
    %906 = vperm.xlu0 %905, %v829
    %v907 = vpop.permute.xlu0 %906
    %909 = vset.pattern.permute.xlu0 3
    %910 = vperm.xlu0 %909, %v830
    %v911 = vpop.permute.xlu0 %910
    %913 = vset.pattern.permute.xlu0 3
    %914 = vperm.xlu0 %913, %v831
    %v915 = vpop.permute.xlu0 %914
    %917 = vset.pattern.permute.xlu0 3
    %918 = vperm.xlu0 %917, %v832
    %v919 = vpop.permute.xlu0 %918
    %v921 = vmul.f32 %v907, %v430
    %v922 = vmul.f32 %v911, %v430
    %v923 = vmul.f32 %v915, %v430
    %v924 = vmul.f32 %v919, %v430
    %v925 = vadd.f32 %v901, %v921
    %v926 = vadd.f32 %v902, %v922
    %v927 = vadd.f32 %v903, %v923
    %v928 = vadd.f32 %v904, %v924
    %929 = vset.pattern.permute.xlu0 4
    %930 = vperm.xlu0 %929, %v829
    %v931 = vpop.permute.xlu0 %930
    %933 = vset.pattern.permute.xlu0 4
    %934 = vperm.xlu0 %933, %v830
    %v935 = vpop.permute.xlu0 %934
    %937 = vset.pattern.permute.xlu0 4
    %938 = vperm.xlu0 %937, %v831
    %v939 = vpop.permute.xlu0 %938
    %941 = vset.pattern.permute.xlu0 4
    %942 = vperm.xlu0 %941, %v832
    %v943 = vpop.permute.xlu0 %942
    %v945 = vmul.f32 %v931, %v458
    %v946 = vmul.f32 %v935, %v458
    %v947 = vmul.f32 %v939, %v458
    %v948 = vmul.f32 %v943, %v458
    %v949 = vadd.f32 %v925, %v945
    %v950 = vadd.f32 %v926, %v946
    %v951 = vadd.f32 %v927, %v947
    %v952 = vadd.f32 %v928, %v948
    %953 = vset.pattern.permute.xlu0 5
    %954 = vperm.xlu0 %953, %v829
    %v955 = vpop.permute.xlu0 %954
    %957 = vset.pattern.permute.xlu0 5
    %958 = vperm.xlu0 %957, %v830
    %v959 = vpop.permute.xlu0 %958
    %961 = vset.pattern.permute.xlu0 5
    %962 = vperm.xlu0 %961, %v831
    %v963 = vpop.permute.xlu0 %962
    %965 = vset.pattern.permute.xlu0 5
    %966 = vperm.xlu0 %965, %v832
    %v967 = vpop.permute.xlu0 %966
    %v969 = vmul.f32 %v955, %v486
    %v970 = vmul.f32 %v959, %v486
    %v971 = vmul.f32 %v963, %v486
    %v972 = vmul.f32 %v967, %v486
    %v973 = vadd.f32 %v949, %v969
    %v974 = vadd.f32 %v950, %v970
    %v975 = vadd.f32 %v951, %v971
    %v976 = vadd.f32 %v952, %v972
    %977 = vset.pattern.permute.xlu0 6
    %978 = vperm.xlu0 %977, %v829
    %v979 = vpop.permute.xlu0 %978
    %981 = vset.pattern.permute.xlu0 6
    %982 = vperm.xlu0 %981, %v830
    %v983 = vpop.permute.xlu0 %982
    %985 = vset.pattern.permute.xlu0 6
    %986 = vperm.xlu0 %985, %v831
    %v987 = vpop.permute.xlu0 %986
    %989 = vset.pattern.permute.xlu0 6
    %990 = vperm.xlu0 %989, %v832
    %v991 = vpop.permute.xlu0 %990
    %v993 = vmul.f32 %v979, %v514
    %v994 = vmul.f32 %v983, %v514
    %v995 = vmul.f32 %v987, %v514
    %v996 = vmul.f32 %v991, %v514
    %v997 = vadd.f32 %v973, %v993
    %v998 = vadd.f32 %v974, %v994
    %v999 = vadd.f32 %v975, %v995
    %v1000 = vadd.f32 %v976, %v996
    %1001 = vset.pattern.permute.xlu0 7
    %1002 = vperm.xlu0 %1001, %v829
    %v1003 = vpop.permute.xlu0 %1002
    %1005 = vset.pattern.permute.xlu0 7
    %1006 = vperm.xlu0 %1005, %v830
    %v1007 = vpop.permute.xlu0 %1006
    %1009 = vset.pattern.permute.xlu0 7
    %1010 = vperm.xlu0 %1009, %v831
    %v1011 = vpop.permute.xlu0 %1010
    %1013 = vset.pattern.permute.xlu0 7
    %1014 = vperm.xlu0 %1013, %v832
    %v1015 = vpop.permute.xlu0 %1014
    %v1017 = vmul.f32 %v1003, %v542
    %v1018 = vmul.f32 %v1007, %v542
    %v1019 = vmul.f32 %v1011, %v542
    %v1020 = vmul.f32 %v1015, %v542
    %v1021 = vadd.f32 %v997, %v1017
    %v1022 = vadd.f32 %v998, %v1018
    %v1023 = vadd.f32 %v999, %v1019
    %v1024 = vadd.f32 %v1000, %v1020
    %v1025 = vadd.f32 %v824, %v1021
    %v1026 = vadd.f32 %v825, %v1022
    %v1027 = vadd.f32 %v826, %v1023
    %v1028 = vadd.f32 %v827, %v1024
    %s1029 = scalar_lea.vmem %s9, 32
    %v1030 = vld [vmem:[%s1029] sm:$0xff]
    %v1031 = vld [vmem:[%s1029 + $0x8] sm:$0xff]
    %v1032 = vld [vmem:[%s1029 + $0x10] sm:$0xff]
    %v1033 = vld [vmem:[%s1029 + $0x18] sm:$0xff]
    %1035 = vset.pattern.permute.xlu0 0
    %1036 = vperm.xlu0 %1035, %v1030
    %v1037 = vpop.permute.xlu0 %1036
    %1040 = vset.pattern.permute.xlu0 0
    %1041 = vperm.xlu0 %1040, %v1031
    %v1042 = vpop.permute.xlu0 %1041
    %1045 = vset.pattern.permute.xlu0 0
    %1046 = vperm.xlu0 %1045, %v1032
    %v1047 = vpop.permute.xlu0 %1046
    %1050 = vset.pattern.permute.xlu0 0
    %1051 = vperm.xlu0 %1050, %v1033
    %v1052 = vpop.permute.xlu0 %1051
    %v1054 = vadd.f32 %v1025, %v1037
    %v1055 = vadd.f32 %v1026, %v1042
    %v1056 = vadd.f32 %v1027, %v1047
    %v1057 = vadd.f32 %v1028, %v1052
    %v1058 = vmax.f32 %v1054, 0.0
    %v1059 = vmax.f32 %v1055, 0.0
    %v1060 = vmax.f32 %v1056, 0.0
    %v1061 = vmax.f32 %v1057, 0.0
    %s1062 = scalar_lea.vmem %s10, 2
    %v1063 = vld [vmem:[%s1062] sm:$0x3]
    %s1064 = scalar_lea.vmem %s12, 2
    %v1065 = vld [vmem:[%s1064] sm:$0x3]
    %1067 = vset.pattern.permute.xlu0 0
    %1068 = vperm.xlu0 %1067, %v1065
    %v1069 = vpop.permute.xlu0 %1068
    %v1072 = vsel %vm187, %v1063, 0
    %1074 = vmatprep.subr.mxu0 0.0
    %1075 = vmatpush1.msra.mxu0 %v1058
    %1076 = vmatprep.subr.mxu0 0.0
    %1077 = vmatpush1.msra.mxu0 %v1059
    %1078 = vmatprep.subr.mxu0 0.0
    %1079 = vmatpush1.msra.mxu0 %v1060
    %1080 = vmatprep.subr.mxu0 0.0
    %1081 = vmatpush1.msra.mxu0 %v1061
    %1082 = vmatprep.subr.mxu0 0.0
    %1083 = vmatpush1.msra.mxu0 0.0
    %1084 = vmatprep.subr.mxu0 0.0
    %1085 = vmatpush1.msra.mxu0 0.0
    %1086 = vmatprep.subr.mxu0 0.0
    %1087 = vmatpush1.msra.mxu0 0.0
    %1088 = vmatprep.subr.mxu0 0.0
    %1089 = vmatpush1.msra.mxu0 0.0
    %1090 = vmatprep.subr.mxu0 0.0
    %1091 = vmatpush1.msra.mxu0 0.0
    %1092 = vmatprep.subr.mxu0 0.0
    %1093 = vmatpush1.msra.mxu0 0.0
    %1094 = vmatprep.subr.mxu0 0.0
    %1095 = vmatpush1.msra.mxu0 0.0
    %1096 = vmatprep.subr.mxu0 0.0
    %1097 = vmatpush1.msra.mxu0 0.0
    %1098 = vmatprep.subr.mxu0 0.0
    %1099 = vmatpush1.msra.mxu0 0.0
    %1100 = vmatprep.subr.mxu0 0.0
    %1101 = vmatpush1.msra.mxu0 0.0
    %1102 = vmatprep.subr.mxu0 0.0
    %1103 = vmatpush1.msra.mxu0 0.0
    %1104 = vmatprep.subr.mxu0 0.0
    %1105 = vmatpush1.msra.mxu0 0.0
    %1106 = vmatprep.subr.mxu0 0.0
    %1107 = vmatpush1.msra.mxu0 0.0
    %1108 = vmatprep.subr.mxu0 0.0
    %1109 = vmatpush1.msra.mxu0 0.0
    %1110 = vmatprep.subr.mxu0 0.0
    %1111 = vmatpush1.msra.mxu0 0.0
    %1112 = vmatprep.subr.mxu0 0.0
    %1113 = vmatpush1.msra.mxu0 0.0
    %1114 = vmatprep.subr.mxu0 0.0
    %1115 = vmatpush1.msra.mxu0 0.0
    %1116 = vmatprep.subr.mxu0 0.0
    %1117 = vmatpush1.msra.mxu0 0.0
    %1118 = vmatprep.subr.mxu0 0.0
    %1119 = vmatpush1.msra.mxu0 0.0
    %1120 = vmatprep.subr.mxu0 0.0
    %1121 = vmatpush1.msra.mxu0 0.0
    %1122 = vmatprep.subr.mxu0 0.0
    %1123 = vmatpush1.msra.mxu0 0.0
    %1124 = vmatprep.subr.mxu0 0.0
    %1125 = vmatpush1.msra.mxu0 0.0
    %1126 = vmatprep.subr.mxu0 0.0
    %1127 = vmatpush1.msra.mxu0 0.0
    %1128 = vmatprep.subr.mxu0 0.0
    %1129 = vmatpush1.msra.mxu0 0.0
    %1130 = vmatprep.subr.mxu0 0.0
    %1131 = vmatpush1.msra.mxu0 0.0
    %1132 = vmatprep.subr.mxu0 0.0
    %1133 = vmatpush1.msra.mxu0 0.0
    %1134 = vmatprep.subr.mxu0 0.0
    %1135 = vmatpush1.msra.mxu0 0.0
    %1136 = vmatprep.subr.mxu0 0.0
    %1137 = vmatpush1.msra.mxu0 0.0
    %1138 = vmatprep.mubr.f32.mxu0 0.0
    %1139 = vmatmul.mubr.f32.gmra.mrb[0].mxu0 %v1072
    %v1140 = vpop.f32.mrb[0].mxu0
    %v1141 = vadd.f32 %v1069, %v1140
    %v1142 = vpop.f32.mrb[0].mxu0
    %1143 = vdwg.mxu0
    %s1144 = scalar_lea.vmem %s11, 2
    %v1145 = vld [vmem:[%s1144] sm:$0x3]
    %s1146 = scalar_lea.vmem %s13, 2
    %v1147 = vld [vmem:[%s1146] sm:$0x3]
    %1149 = vset.pattern.permute.xlu0 0
    %1150 = vperm.xlu0 %1149, %v1147
    %v1151 = vpop.permute.xlu0 %1150
    %v1154 = vsel %vm187, %v1145, 0
    %1156 = vmatprep.subr.mxu0 0.0
    %1157 = vmatpush1.msra.mxu0 %v1058
    %1158 = vmatprep.subr.mxu0 0.0
    %1159 = vmatpush1.msra.mxu0 %v1059
    %1160 = vmatprep.subr.mxu0 0.0
    %1161 = vmatpush1.msra.mxu0 %v1060
    %1162 = vmatprep.subr.mxu0 0.0
    %1163 = vmatpush1.msra.mxu0 %v1061
    %1164 = vmatprep.subr.mxu0 0.0
    %1165 = vmatpush1.msra.mxu0 0.0
    %1166 = vmatprep.subr.mxu0 0.0
    %1167 = vmatpush1.msra.mxu0 0.0
    %1168 = vmatprep.subr.mxu0 0.0
    %1169 = vmatpush1.msra.mxu0 0.0
    %1170 = vmatprep.subr.mxu0 0.0
    %1171 = vmatpush1.msra.mxu0 0.0
    %1172 = vmatprep.subr.mxu0 0.0
    %1173 = vmatpush1.msra.mxu0 0.0
    %1174 = vmatprep.subr.mxu0 0.0
    %1175 = vmatpush1.msra.mxu0 0.0
    %1176 = vmatprep.subr.mxu0 0.0
    %1177 = vmatpush1.msra.mxu0 0.0
    %1178 = vmatprep.subr.mxu0 0.0
    %1179 = vmatpush1.msra.mxu0 0.0
    %1180 = vmatprep.subr.mxu0 0.0
    %1181 = vmatpush1.msra.mxu0 0.0
    %1182 = vmatprep.subr.mxu0 0.0
    %1183 = vmatpush1.msra.mxu0 0.0
    %1184 = vmatprep.subr.mxu0 0.0
    %1185 = vmatpush1.msra.mxu0 0.0
    %1186 = vmatprep.subr.mxu0 0.0
    %1187 = vmatpush1.msra.mxu0 0.0
    %1188 = vmatprep.subr.mxu0 0.0
    %1189 = vmatpush1.msra.mxu0 0.0
    %1190 = vmatprep.subr.mxu0 0.0
    %1191 = vmatpush1.msra.mxu0 0.0
    %1192 = vmatprep.subr.mxu0 0.0
    %1193 = vmatpush1.msra.mxu0 0.0
    %1194 = vmatprep.subr.mxu0 0.0
    %1195 = vmatpush1.msra.mxu0 0.0
    %1196 = vmatprep.subr.mxu0 0.0
    %1197 = vmatpush1.msra.mxu0 0.0
    %1198 = vmatprep.subr.mxu0 0.0
    %1199 = vmatpush1.msra.mxu0 0.0
    %1200 = vmatprep.subr.mxu0 0.0
    %1201 = vmatpush1.msra.mxu0 0.0
    %1202 = vmatprep.subr.mxu0 0.0
    %1203 = vmatpush1.msra.mxu0 0.0
    %1204 = vmatprep.subr.mxu0 0.0
    %1205 = vmatpush1.msra.mxu0 0.0
    %1206 = vmatprep.subr.mxu0 0.0
    %1207 = vmatpush1.msra.mxu0 0.0
    %1208 = vmatprep.subr.mxu0 0.0
    %1209 = vmatpush1.msra.mxu0 0.0
    %1210 = vmatprep.subr.mxu0 0.0
    %1211 = vmatpush1.msra.mxu0 0.0
    %1212 = vmatprep.subr.mxu0 0.0
    %1213 = vmatpush1.msra.mxu0 0.0
    %1214 = vmatprep.subr.mxu0 0.0
    %1215 = vmatpush1.msra.mxu0 0.0
    %1216 = vmatprep.subr.mxu0 0.0
    %1217 = vmatpush1.msra.mxu0 0.0
    %1218 = vmatprep.subr.mxu0 0.0
    %1219 = vmatpush1.msra.mxu0 0.0
    %1220 = vmatprep.mubr.f32.mxu0 0.0
    %1221 = vmatmul.mubr.f32.gmra.mrb[0].mxu0 %v1154
    %v1222 = vpop.f32.mrb[0].mxu0
    %v1223 = vadd.f32 %v1151, %v1222
    %v1224 = vpop.f32.mrb[0].mxu0
    %1225 = vdwg.mxu0
    %v1226 = vxor.u32 %v1223, 2147483648
    %v1227 = vmul.f32 %v1226, 1.442695
    %v1228 = vpow.pop %v1227
    %v1229 = vadd.f32 %v1228, 1.0
    %v1230 = vrcp.pop %v1229
    %v1231 = vmul.f32 1.0, %v1230
    %v1232 = vadd.f32 %v1231, 0.001
    %v1233 = vmul.f32 %v261, %v1232
    %v1234 = vadd.f32 %v1233, %v1141
    %v1235 = vlog2.pop %v1232
    %v1236 = vmul.f32 %v1235, 0.6931472
    %v1237 = vsel %vm758, %v1236, 0.0
    %v1238 = vrot.slane %v1237, 4
    %v1239 = vadd.f32 %v1237, %v1238
    %v1240 = vrot.slane %v1239, 2
    %v1241 = vadd.f32 %v1239, %v1240
    %v1242 = vrot.slane %v1241, 1
    %v1243 = vadd.f32 %v1241, %v1242
    %v1244 = vadd.f32 %v766, %v1243
    %s1245 = scalar_lea.vmem %s7, 64
    %v1246 = vld [vmem:[%s1245] sm:$0xff]
    %v1247 = vld [vmem:[%s1245 + $0x8] sm:$0xff]
    %v1248 = vld [vmem:[%s1245 + $0x10] sm:$0xff]
    %v1249 = vld [vmem:[%s1245 + $0x18] sm:$0xff]
    %1251 = vset.pattern.permute.xlu0 0
    %1252 = vperm.xlu0 %1251, %v1246
    %v1253 = vpop.permute.xlu0 %1252
    %1256 = vset.pattern.permute.xlu0 0
    %1257 = vperm.xlu0 %1256, %v1247
    %v1258 = vpop.permute.xlu0 %1257
    %1261 = vset.pattern.permute.xlu0 0
    %1262 = vperm.xlu0 %1261, %v1248
    %v1263 = vpop.permute.xlu0 %1262
    %1266 = vset.pattern.permute.xlu0 0
    %1267 = vperm.xlu0 %1266, %v1249
    %v1268 = vpop.permute.xlu0 %1267
    %v1270 = vlaneseq
    %v1271 = vshrl.u32 %v1270, 7
    %v1272 = vsub.s32 0, %v1271
    %v1273 = vrot.slane %v1234, %v1272
    %v1274 = vmul.f32 %v1253, %v1273
    %v1275 = vmul.f32 %v1258, %v1273
    %v1276 = vmul.f32 %v1263, %v1273
    %v1277 = vmul.f32 %v1268, %v1273
    %1278 = vset.pattern.permute.xlu0 1
    %1279 = vperm.xlu0 %1278, %v1246
    %v1280 = vpop.permute.xlu0 %1279
    %1282 = vset.pattern.permute.xlu0 1
    %1283 = vperm.xlu0 %1282, %v1247
    %v1284 = vpop.permute.xlu0 %1283
    %1286 = vset.pattern.permute.xlu0 1
    %1287 = vperm.xlu0 %1286, %v1248
    %v1288 = vpop.permute.xlu0 %1287
    %1290 = vset.pattern.permute.xlu0 1
    %1291 = vperm.xlu0 %1290, %v1249
    %v1292 = vpop.permute.xlu0 %1291
    %v1294 = vlaneseq
    %v1295 = vshrl.u32 %v1294, 7
    %v1296 = vsub.s32 1, %v1295
    %v1297 = vrot.slane %v1234, %v1296
    %v1298 = vmul.f32 %v1280, %v1297
    %v1299 = vmul.f32 %v1284, %v1297
    %v1300 = vmul.f32 %v1288, %v1297
    %v1301 = vmul.f32 %v1292, %v1297
    %v1302 = vadd.f32 %v1274, %v1298
    %v1303 = vadd.f32 %v1275, %v1299
    %v1304 = vadd.f32 %v1276, %v1300
    %v1305 = vadd.f32 %v1277, %v1301
    %s1306 = scalar_lea.vmem %s8, 64
    %v1307 = vld [vmem:[%s1306] sm:$0xff]
    %v1308 = vld [vmem:[%s1306 + $0x8] sm:$0xff]
    %v1309 = vld [vmem:[%s1306 + $0x10] sm:$0xff]
    %v1310 = vld [vmem:[%s1306 + $0x18] sm:$0xff]
    %1312 = vset.pattern.permute.xlu0 0
    %1313 = vperm.xlu0 %1312, %v1307
    %v1314 = vpop.permute.xlu0 %1313
    %1317 = vset.pattern.permute.xlu0 0
    %1318 = vperm.xlu0 %1317, %v1308
    %v1319 = vpop.permute.xlu0 %1318
    %1322 = vset.pattern.permute.xlu0 0
    %1323 = vperm.xlu0 %1322, %v1309
    %v1324 = vpop.permute.xlu0 %1323
    %1327 = vset.pattern.permute.xlu0 0
    %1328 = vperm.xlu0 %1327, %v1310
    %v1329 = vpop.permute.xlu0 %1328
    %v1331 = vmul.f32 %v1314, %v350
    %v1332 = vmul.f32 %v1319, %v350
    %v1333 = vmul.f32 %v1324, %v350
    %v1334 = vmul.f32 %v1329, %v350
    %1335 = vset.pattern.permute.xlu0 1
    %1336 = vperm.xlu0 %1335, %v1307
    %v1337 = vpop.permute.xlu0 %1336
    %1339 = vset.pattern.permute.xlu0 1
    %1340 = vperm.xlu0 %1339, %v1308
    %v1341 = vpop.permute.xlu0 %1340
    %1343 = vset.pattern.permute.xlu0 1
    %1344 = vperm.xlu0 %1343, %v1309
    %v1345 = vpop.permute.xlu0 %1344
    %1347 = vset.pattern.permute.xlu0 1
    %1348 = vperm.xlu0 %1347, %v1310
    %v1349 = vpop.permute.xlu0 %1348
    %v1351 = vmul.f32 %v1337, %v374
    %v1352 = vmul.f32 %v1341, %v374
    %v1353 = vmul.f32 %v1345, %v374
    %v1354 = vmul.f32 %v1349, %v374
    %v1355 = vadd.f32 %v1331, %v1351
    %v1356 = vadd.f32 %v1332, %v1352
    %v1357 = vadd.f32 %v1333, %v1353
    %v1358 = vadd.f32 %v1334, %v1354
    %1359 = vset.pattern.permute.xlu0 2
    %1360 = vperm.xlu0 %1359, %v1307
    %v1361 = vpop.permute.xlu0 %1360
    %1363 = vset.pattern.permute.xlu0 2
    %1364 = vperm.xlu0 %1363, %v1308
    %v1365 = vpop.permute.xlu0 %1364
    %1367 = vset.pattern.permute.xlu0 2
    %1368 = vperm.xlu0 %1367, %v1309
    %v1369 = vpop.permute.xlu0 %1368
    %1371 = vset.pattern.permute.xlu0 2
    %1372 = vperm.xlu0 %1371, %v1310
    %v1373 = vpop.permute.xlu0 %1372
    %v1375 = vmul.f32 %v1361, %v402
    %v1376 = vmul.f32 %v1365, %v402
    %v1377 = vmul.f32 %v1369, %v402
    %v1378 = vmul.f32 %v1373, %v402
    %v1379 = vadd.f32 %v1355, %v1375
    %v1380 = vadd.f32 %v1356, %v1376
    %v1381 = vadd.f32 %v1357, %v1377
    %v1382 = vadd.f32 %v1358, %v1378
    %1383 = vset.pattern.permute.xlu0 3
    %1384 = vperm.xlu0 %1383, %v1307
    %v1385 = vpop.permute.xlu0 %1384
    %1387 = vset.pattern.permute.xlu0 3
    %1388 = vperm.xlu0 %1387, %v1308
    %v1389 = vpop.permute.xlu0 %1388
    %1391 = vset.pattern.permute.xlu0 3
    %1392 = vperm.xlu0 %1391, %v1309
    %v1393 = vpop.permute.xlu0 %1392
    %1395 = vset.pattern.permute.xlu0 3
    %1396 = vperm.xlu0 %1395, %v1310
    %v1397 = vpop.permute.xlu0 %1396
    %v1399 = vmul.f32 %v1385, %v430
    %v1400 = vmul.f32 %v1389, %v430
    %v1401 = vmul.f32 %v1393, %v430
    %v1402 = vmul.f32 %v1397, %v430
    %v1403 = vadd.f32 %v1379, %v1399
    %v1404 = vadd.f32 %v1380, %v1400
    %v1405 = vadd.f32 %v1381, %v1401
    %v1406 = vadd.f32 %v1382, %v1402
    %1407 = vset.pattern.permute.xlu0 4
    %1408 = vperm.xlu0 %1407, %v1307
    %v1409 = vpop.permute.xlu0 %1408
    %1411 = vset.pattern.permute.xlu0 4
    %1412 = vperm.xlu0 %1411, %v1308
    %v1413 = vpop.permute.xlu0 %1412
    %1415 = vset.pattern.permute.xlu0 4
    %1416 = vperm.xlu0 %1415, %v1309
    %v1417 = vpop.permute.xlu0 %1416
    %1419 = vset.pattern.permute.xlu0 4
    %1420 = vperm.xlu0 %1419, %v1310
    %v1421 = vpop.permute.xlu0 %1420
    %v1423 = vmul.f32 %v1409, %v458
    %v1424 = vmul.f32 %v1413, %v458
    %v1425 = vmul.f32 %v1417, %v458
    %v1426 = vmul.f32 %v1421, %v458
    %v1427 = vadd.f32 %v1403, %v1423
    %v1428 = vadd.f32 %v1404, %v1424
    %v1429 = vadd.f32 %v1405, %v1425
    %v1430 = vadd.f32 %v1406, %v1426
    %1431 = vset.pattern.permute.xlu0 5
    %1432 = vperm.xlu0 %1431, %v1307
    %v1433 = vpop.permute.xlu0 %1432
    %1435 = vset.pattern.permute.xlu0 5
    %1436 = vperm.xlu0 %1435, %v1308
    %v1437 = vpop.permute.xlu0 %1436
    %1439 = vset.pattern.permute.xlu0 5
    %1440 = vperm.xlu0 %1439, %v1309
    %v1441 = vpop.permute.xlu0 %1440
    %1443 = vset.pattern.permute.xlu0 5
    %1444 = vperm.xlu0 %1443, %v1310
    %v1445 = vpop.permute.xlu0 %1444
    %v1447 = vmul.f32 %v1433, %v486
    %v1448 = vmul.f32 %v1437, %v486
    %v1449 = vmul.f32 %v1441, %v486
    %v1450 = vmul.f32 %v1445, %v486
    %v1451 = vadd.f32 %v1427, %v1447
    %v1452 = vadd.f32 %v1428, %v1448
    %v1453 = vadd.f32 %v1429, %v1449
    %v1454 = vadd.f32 %v1430, %v1450
    %1455 = vset.pattern.permute.xlu0 6
    %1456 = vperm.xlu0 %1455, %v1307
    %v1457 = vpop.permute.xlu0 %1456
    %1459 = vset.pattern.permute.xlu0 6
    %1460 = vperm.xlu0 %1459, %v1308
    %v1461 = vpop.permute.xlu0 %1460
    %1463 = vset.pattern.permute.xlu0 6
    %1464 = vperm.xlu0 %1463, %v1309
    %v1465 = vpop.permute.xlu0 %1464
    %1467 = vset.pattern.permute.xlu0 6
    %1468 = vperm.xlu0 %1467, %v1310
    %v1469 = vpop.permute.xlu0 %1468
    %v1471 = vmul.f32 %v1457, %v514
    %v1472 = vmul.f32 %v1461, %v514
    %v1473 = vmul.f32 %v1465, %v514
    %v1474 = vmul.f32 %v1469, %v514
    %v1475 = vadd.f32 %v1451, %v1471
    %v1476 = vadd.f32 %v1452, %v1472
    %v1477 = vadd.f32 %v1453, %v1473
    %v1478 = vadd.f32 %v1454, %v1474
    %1479 = vset.pattern.permute.xlu0 7
    %1480 = vperm.xlu0 %1479, %v1307
    %v1481 = vpop.permute.xlu0 %1480
    %1483 = vset.pattern.permute.xlu0 7
    %1484 = vperm.xlu0 %1483, %v1308
    %v1485 = vpop.permute.xlu0 %1484
    %1487 = vset.pattern.permute.xlu0 7
    %1488 = vperm.xlu0 %1487, %v1309
    %v1489 = vpop.permute.xlu0 %1488
    %1491 = vset.pattern.permute.xlu0 7
    %1492 = vperm.xlu0 %1491, %v1310
    %v1493 = vpop.permute.xlu0 %1492
    %v1495 = vmul.f32 %v1481, %v542
    %v1496 = vmul.f32 %v1485, %v542
    %v1497 = vmul.f32 %v1489, %v542
    %v1498 = vmul.f32 %v1493, %v542
    %v1499 = vadd.f32 %v1475, %v1495
    %v1500 = vadd.f32 %v1476, %v1496
    %v1501 = vadd.f32 %v1477, %v1497
    %v1502 = vadd.f32 %v1478, %v1498
    %v1503 = vadd.f32 %v1302, %v1499
    %v1504 = vadd.f32 %v1303, %v1500
    %v1505 = vadd.f32 %v1304, %v1501
    %v1506 = vadd.f32 %v1305, %v1502
    %s1507 = scalar_lea.vmem %s9, 64
    %v1508 = vld [vmem:[%s1507] sm:$0xff]
    %v1509 = vld [vmem:[%s1507 + $0x8] sm:$0xff]
    %v1510 = vld [vmem:[%s1507 + $0x10] sm:$0xff]
    %v1511 = vld [vmem:[%s1507 + $0x18] sm:$0xff]
    %1513 = vset.pattern.permute.xlu0 0
    %1514 = vperm.xlu0 %1513, %v1508
    %v1515 = vpop.permute.xlu0 %1514
    %1518 = vset.pattern.permute.xlu0 0
    %1519 = vperm.xlu0 %1518, %v1509
    %v1520 = vpop.permute.xlu0 %1519
    %1523 = vset.pattern.permute.xlu0 0
    %1524 = vperm.xlu0 %1523, %v1510
    %v1525 = vpop.permute.xlu0 %1524
    %1528 = vset.pattern.permute.xlu0 0
    %1529 = vperm.xlu0 %1528, %v1511
    %v1530 = vpop.permute.xlu0 %1529
    %v1532 = vadd.f32 %v1503, %v1515
    %v1533 = vadd.f32 %v1504, %v1520
    %v1534 = vadd.f32 %v1505, %v1525
    %v1535 = vadd.f32 %v1506, %v1530
    %v1536 = vmax.f32 %v1532, 0.0
    %v1537 = vmax.f32 %v1533, 0.0
    %v1538 = vmax.f32 %v1534, 0.0
    %v1539 = vmax.f32 %v1535, 0.0
    %s1540 = scalar_lea.vmem %s10, 4
    %v1541 = vld [vmem:[%s1540] sm:$0x3]
    %s1542 = scalar_lea.vmem %s12, 4
    %v1543 = vld [vmem:[%s1542] sm:$0x3]
    %1545 = vset.pattern.permute.xlu0 0
    %1546 = vperm.xlu0 %1545, %v1543
    %v1547 = vpop.permute.xlu0 %1546
    %v1550 = vsel %vm187, %v1541, 0
    %1552 = vmatprep.subr.mxu0 0.0
    %1553 = vmatpush1.msra.mxu0 %v1536
    %1554 = vmatprep.subr.mxu0 0.0
    %1555 = vmatpush1.msra.mxu0 %v1537
    %1556 = vmatprep.subr.mxu0 0.0
    %1557 = vmatpush1.msra.mxu0 %v1538
    %1558 = vmatprep.subr.mxu0 0.0
    %1559 = vmatpush1.msra.mxu0 %v1539
    %1560 = vmatprep.subr.mxu0 0.0
    %1561 = vmatpush1.msra.mxu0 0.0
    %1562 = vmatprep.subr.mxu0 0.0
    %1563 = vmatpush1.msra.mxu0 0.0
    %1564 = vmatprep.subr.mxu0 0.0
    %1565 = vmatpush1.msra.mxu0 0.0
    %1566 = vmatprep.subr.mxu0 0.0
    %1567 = vmatpush1.msra.mxu0 0.0
    %1568 = vmatprep.subr.mxu0 0.0
    %1569 = vmatpush1.msra.mxu0 0.0
    %1570 = vmatprep.subr.mxu0 0.0
    %1571 = vmatpush1.msra.mxu0 0.0
    %1572 = vmatprep.subr.mxu0 0.0
    %1573 = vmatpush1.msra.mxu0 0.0
    %1574 = vmatprep.subr.mxu0 0.0
    %1575 = vmatpush1.msra.mxu0 0.0
    %1576 = vmatprep.subr.mxu0 0.0
    %1577 = vmatpush1.msra.mxu0 0.0
    %1578 = vmatprep.subr.mxu0 0.0
    %1579 = vmatpush1.msra.mxu0 0.0
    %1580 = vmatprep.subr.mxu0 0.0
    %1581 = vmatpush1.msra.mxu0 0.0
    %1582 = vmatprep.subr.mxu0 0.0
    %1583 = vmatpush1.msra.mxu0 0.0
    %1584 = vmatprep.subr.mxu0 0.0
    %1585 = vmatpush1.msra.mxu0 0.0
    %1586 = vmatprep.subr.mxu0 0.0
    %1587 = vmatpush1.msra.mxu0 0.0
    %1588 = vmatprep.subr.mxu0 0.0
    %1589 = vmatpush1.msra.mxu0 0.0
    %1590 = vmatprep.subr.mxu0 0.0
    %1591 = vmatpush1.msra.mxu0 0.0
    %1592 = vmatprep.subr.mxu0 0.0
    %1593 = vmatpush1.msra.mxu0 0.0
    %1594 = vmatprep.subr.mxu0 0.0
    %1595 = vmatpush1.msra.mxu0 0.0
    %1596 = vmatprep.subr.mxu0 0.0
    %1597 = vmatpush1.msra.mxu0 0.0
    %1598 = vmatprep.subr.mxu0 0.0
    %1599 = vmatpush1.msra.mxu0 0.0
    %1600 = vmatprep.subr.mxu0 0.0
    %1601 = vmatpush1.msra.mxu0 0.0
    %1602 = vmatprep.subr.mxu0 0.0
    %1603 = vmatpush1.msra.mxu0 0.0
    %1604 = vmatprep.subr.mxu0 0.0
    %1605 = vmatpush1.msra.mxu0 0.0
    %1606 = vmatprep.subr.mxu0 0.0
    %1607 = vmatpush1.msra.mxu0 0.0
    %1608 = vmatprep.subr.mxu0 0.0
    %1609 = vmatpush1.msra.mxu0 0.0
    %1610 = vmatprep.subr.mxu0 0.0
    %1611 = vmatpush1.msra.mxu0 0.0
    %1612 = vmatprep.subr.mxu0 0.0
    %1613 = vmatpush1.msra.mxu0 0.0
    %1614 = vmatprep.subr.mxu0 0.0
    %1615 = vmatpush1.msra.mxu0 0.0
    %1616 = vmatprep.mubr.f32.mxu0 0.0
    %1617 = vmatmul.mubr.f32.gmra.mrb[0].mxu0 %v1550
    %v1618 = vpop.f32.mrb[0].mxu0
    %v1619 = vadd.f32 %v1547, %v1618
    %v1620 = vpop.f32.mrb[0].mxu0
    %1621 = vdwg.mxu0
    %s1622 = scalar_lea.vmem %s11, 4
    %v1623 = vld [vmem:[%s1622] sm:$0x3]
    %s1624 = scalar_lea.vmem %s13, 4
    %v1625 = vld [vmem:[%s1624] sm:$0x3]
    %1627 = vset.pattern.permute.xlu0 0
    %1628 = vperm.xlu0 %1627, %v1625
    %v1629 = vpop.permute.xlu0 %1628
    %v1632 = vsel %vm187, %v1623, 0
    %1634 = vmatprep.subr.mxu0 0.0
    %1635 = vmatpush1.msra.mxu0 %v1536
    %1636 = vmatprep.subr.mxu0 0.0
    %1637 = vmatpush1.msra.mxu0 %v1537
    %1638 = vmatprep.subr.mxu0 0.0
    %1639 = vmatpush1.msra.mxu0 %v1538
    %1640 = vmatprep.subr.mxu0 0.0
    %1641 = vmatpush1.msra.mxu0 %v1539
    %1642 = vmatprep.subr.mxu0 0.0
    %1643 = vmatpush1.msra.mxu0 0.0
    %1644 = vmatprep.subr.mxu0 0.0
    %1645 = vmatpush1.msra.mxu0 0.0
    %1646 = vmatprep.subr.mxu0 0.0
    %1647 = vmatpush1.msra.mxu0 0.0
    %1648 = vmatprep.subr.mxu0 0.0
    %1649 = vmatpush1.msra.mxu0 0.0
    %1650 = vmatprep.subr.mxu0 0.0
    %1651 = vmatpush1.msra.mxu0 0.0
    %1652 = vmatprep.subr.mxu0 0.0
    %1653 = vmatpush1.msra.mxu0 0.0
    %1654 = vmatprep.subr.mxu0 0.0
    %1655 = vmatpush1.msra.mxu0 0.0
    %1656 = vmatprep.subr.mxu0 0.0
    %1657 = vmatpush1.msra.mxu0 0.0
    %1658 = vmatprep.subr.mxu0 0.0
    %1659 = vmatpush1.msra.mxu0 0.0
    %1660 = vmatprep.subr.mxu0 0.0
    %1661 = vmatpush1.msra.mxu0 0.0
    %1662 = vmatprep.subr.mxu0 0.0
    %1663 = vmatpush1.msra.mxu0 0.0
    %1664 = vmatprep.subr.mxu0 0.0
    %1665 = vmatpush1.msra.mxu0 0.0
    %1666 = vmatprep.subr.mxu0 0.0
    %1667 = vmatpush1.msra.mxu0 0.0
    %1668 = vmatprep.subr.mxu0 0.0
    %1669 = vmatpush1.msra.mxu0 0.0
    %1670 = vmatprep.subr.mxu0 0.0
    %1671 = vmatpush1.msra.mxu0 0.0
    %1672 = vmatprep.subr.mxu0 0.0
    %1673 = vmatpush1.msra.mxu0 0.0
    %1674 = vmatprep.subr.mxu0 0.0
    %1675 = vmatpush1.msra.mxu0 0.0
    %1676 = vmatprep.subr.mxu0 0.0
    %1677 = vmatpush1.msra.mxu0 0.0
    %1678 = vmatprep.subr.mxu0 0.0
    %1679 = vmatpush1.msra.mxu0 0.0
    %1680 = vmatprep.subr.mxu0 0.0
    %1681 = vmatpush1.msra.mxu0 0.0
    %1682 = vmatprep.subr.mxu0 0.0
    %1683 = vmatpush1.msra.mxu0 0.0
    %1684 = vmatprep.subr.mxu0 0.0
    %1685 = vmatpush1.msra.mxu0 0.0
    %1686 = vmatprep.subr.mxu0 0.0
    %1687 = vmatpush1.msra.mxu0 0.0
    %1688 = vmatprep.subr.mxu0 0.0
    %1689 = vmatpush1.msra.mxu0 0.0
    %1690 = vmatprep.subr.mxu0 0.0
    %1691 = vmatpush1.msra.mxu0 0.0
    %1692 = vmatprep.subr.mxu0 0.0
    %1693 = vmatpush1.msra.mxu0 0.0
    %1694 = vmatprep.subr.mxu0 0.0
    %1695 = vmatpush1.msra.mxu0 0.0
    %1696 = vmatprep.subr.mxu0 0.0
    %1697 = vmatpush1.msra.mxu0 0.0
    %1698 = vmatprep.mubr.f32.mxu0 0.0
    %1699 = vmatmul.mubr.f32.gmra.mrb[0].mxu0 %v1632
    %v1700 = vpop.f32.mrb[0].mxu0
    %v1701 = vadd.f32 %v1629, %v1700
    %v1702 = vpop.f32.mrb[0].mxu0
    %1703 = vdwg.mxu0
    %v1704 = vxor.u32 %v1701, 2147483648
    %v1705 = vmul.f32 %v1704, 1.442695
    %v1706 = vpow.pop %v1705
    %v1707 = vadd.f32 %v1706, 1.0
    %v1708 = vrcp.pop %v1707
    %v1709 = vmul.f32 1.0, %v1708
    %v1710 = vadd.f32 %v1709, 0.001
    %v1711 = vmul.f32 %v755, %v1710
    %v1712 = vadd.f32 %v1711, %v1619
    %v1713 = vlog2.pop %v1710
    %v1714 = vmul.f32 %v1713, 0.6931472
    %v1715 = vsel %vm758, %v1714, 0.0
    %v1716 = vrot.slane %v1715, 4
    %v1717 = vadd.f32 %v1715, %v1716
    %v1718 = vrot.slane %v1717, 2
    %v1719 = vadd.f32 %v1717, %v1718
    %v1720 = vrot.slane %v1719, 1
    %v1721 = vadd.f32 %v1719, %v1720
    %v1722 = vadd.f32 %v1244, %v1721
    %s1723 = scalar_lea.vmem %s7, 96
    %v1724 = vld [vmem:[%s1723] sm:$0xff]
    %v1725 = vld [vmem:[%s1723 + $0x8] sm:$0xff]
    %v1726 = vld [vmem:[%s1723 + $0x10] sm:$0xff]
    %v1727 = vld [vmem:[%s1723 + $0x18] sm:$0xff]
    %1729 = vset.pattern.permute.xlu0 0
    %1730 = vperm.xlu0 %1729, %v1724
    %v1731 = vpop.permute.xlu0 %1730
    %1734 = vset.pattern.permute.xlu0 0
    %1735 = vperm.xlu0 %1734, %v1725
    %v1736 = vpop.permute.xlu0 %1735
    %1739 = vset.pattern.permute.xlu0 0
    %1740 = vperm.xlu0 %1739, %v1726
    %v1741 = vpop.permute.xlu0 %1740
    %1744 = vset.pattern.permute.xlu0 0
    %1745 = vperm.xlu0 %1744, %v1727
    %v1746 = vpop.permute.xlu0 %1745
    %v1748 = vlaneseq
    %v1749 = vshrl.u32 %v1748, 7
    %v1750 = vsub.s32 0, %v1749
    %v1751 = vrot.slane %v1712, %v1750
    %v1752 = vmul.f32 %v1731, %v1751
    %v1753 = vmul.f32 %v1736, %v1751
    %v1754 = vmul.f32 %v1741, %v1751
    %v1755 = vmul.f32 %v1746, %v1751
    %1756 = vset.pattern.permute.xlu0 1
    %1757 = vperm.xlu0 %1756, %v1724
    %v1758 = vpop.permute.xlu0 %1757
    %1760 = vset.pattern.permute.xlu0 1
    %1761 = vperm.xlu0 %1760, %v1725
    %v1762 = vpop.permute.xlu0 %1761
    %1764 = vset.pattern.permute.xlu0 1
    %1765 = vperm.xlu0 %1764, %v1726
    %v1766 = vpop.permute.xlu0 %1765
    %1768 = vset.pattern.permute.xlu0 1
    %1769 = vperm.xlu0 %1768, %v1727
    %v1770 = vpop.permute.xlu0 %1769
    %v1772 = vlaneseq
    %v1773 = vshrl.u32 %v1772, 7
    %v1774 = vsub.s32 1, %v1773
    %v1775 = vrot.slane %v1712, %v1774
    %v1776 = vmul.f32 %v1758, %v1775
    %v1777 = vmul.f32 %v1762, %v1775
    %v1778 = vmul.f32 %v1766, %v1775
    %v1779 = vmul.f32 %v1770, %v1775
    %v1780 = vadd.f32 %v1752, %v1776
    %v1781 = vadd.f32 %v1753, %v1777
    %v1782 = vadd.f32 %v1754, %v1778
    %v1783 = vadd.f32 %v1755, %v1779
    %s1784 = scalar_lea.vmem %s8, 96
    %v1785 = vld [vmem:[%s1784] sm:$0xff]
    %v1786 = vld [vmem:[%s1784 + $0x8] sm:$0xff]
    %v1787 = vld [vmem:[%s1784 + $0x10] sm:$0xff]
    %v1788 = vld [vmem:[%s1784 + $0x18] sm:$0xff]
    %1790 = vset.pattern.permute.xlu0 0
    %1791 = vperm.xlu0 %1790, %v1785
    %v1792 = vpop.permute.xlu0 %1791
    %1795 = vset.pattern.permute.xlu0 0
    %1796 = vperm.xlu0 %1795, %v1786
    %v1797 = vpop.permute.xlu0 %1796
    %1800 = vset.pattern.permute.xlu0 0
    %1801 = vperm.xlu0 %1800, %v1787
    %v1802 = vpop.permute.xlu0 %1801
    %1805 = vset.pattern.permute.xlu0 0
    %1806 = vperm.xlu0 %1805, %v1788
    %v1807 = vpop.permute.xlu0 %1806
    %v1809 = vmul.f32 %v1792, %v350
    %v1810 = vmul.f32 %v1797, %v350
    %v1811 = vmul.f32 %v1802, %v350
    %v1812 = vmul.f32 %v1807, %v350
    %1813 = vset.pattern.permute.xlu0 1
    %1814 = vperm.xlu0 %1813, %v1785
    %v1815 = vpop.permute.xlu0 %1814
    %1817 = vset.pattern.permute.xlu0 1
    %1818 = vperm.xlu0 %1817, %v1786
    %v1819 = vpop.permute.xlu0 %1818
    %1821 = vset.pattern.permute.xlu0 1
    %1822 = vperm.xlu0 %1821, %v1787
    %v1823 = vpop.permute.xlu0 %1822
    %1825 = vset.pattern.permute.xlu0 1
    %1826 = vperm.xlu0 %1825, %v1788
    %v1827 = vpop.permute.xlu0 %1826
    %v1829 = vmul.f32 %v1815, %v374
    %v1830 = vmul.f32 %v1819, %v374
    %v1831 = vmul.f32 %v1823, %v374
    %v1832 = vmul.f32 %v1827, %v374
    %v1833 = vadd.f32 %v1809, %v1829
    %v1834 = vadd.f32 %v1810, %v1830
    %v1835 = vadd.f32 %v1811, %v1831
    %v1836 = vadd.f32 %v1812, %v1832
    %1837 = vset.pattern.permute.xlu0 2
    %1838 = vperm.xlu0 %1837, %v1785
    %v1839 = vpop.permute.xlu0 %1838
    %1841 = vset.pattern.permute.xlu0 2
    %1842 = vperm.xlu0 %1841, %v1786
    %v1843 = vpop.permute.xlu0 %1842
    %1845 = vset.pattern.permute.xlu0 2
    %1846 = vperm.xlu0 %1845, %v1787
    %v1847 = vpop.permute.xlu0 %1846
    %1849 = vset.pattern.permute.xlu0 2
    %1850 = vperm.xlu0 %1849, %v1788
    %v1851 = vpop.permute.xlu0 %1850
    %v1853 = vmul.f32 %v1839, %v402
    %v1854 = vmul.f32 %v1843, %v402
    %v1855 = vmul.f32 %v1847, %v402
    %v1856 = vmul.f32 %v1851, %v402
    %v1857 = vadd.f32 %v1833, %v1853
    %v1858 = vadd.f32 %v1834, %v1854
    %v1859 = vadd.f32 %v1835, %v1855
    %v1860 = vadd.f32 %v1836, %v1856
    %1861 = vset.pattern.permute.xlu0 3
    %1862 = vperm.xlu0 %1861, %v1785
    %v1863 = vpop.permute.xlu0 %1862
    %1865 = vset.pattern.permute.xlu0 3
    %1866 = vperm.xlu0 %1865, %v1786
    %v1867 = vpop.permute.xlu0 %1866
    %1869 = vset.pattern.permute.xlu0 3
    %1870 = vperm.xlu0 %1869, %v1787
    %v1871 = vpop.permute.xlu0 %1870
    %1873 = vset.pattern.permute.xlu0 3
    %1874 = vperm.xlu0 %1873, %v1788
    %v1875 = vpop.permute.xlu0 %1874
    %v1877 = vmul.f32 %v1863, %v430
    %v1878 = vmul.f32 %v1867, %v430
    %v1879 = vmul.f32 %v1871, %v430
    %v1880 = vmul.f32 %v1875, %v430
    %v1881 = vadd.f32 %v1857, %v1877
    %v1882 = vadd.f32 %v1858, %v1878
    %v1883 = vadd.f32 %v1859, %v1879
    %v1884 = vadd.f32 %v1860, %v1880
    %1885 = vset.pattern.permute.xlu0 4
    %1886 = vperm.xlu0 %1885, %v1785
    %v1887 = vpop.permute.xlu0 %1886
    %1889 = vset.pattern.permute.xlu0 4
    %1890 = vperm.xlu0 %1889, %v1786
    %v1891 = vpop.permute.xlu0 %1890
    %1893 = vset.pattern.permute.xlu0 4
    %1894 = vperm.xlu0 %1893, %v1787
    %v1895 = vpop.permute.xlu0 %1894
    %1897 = vset.pattern.permute.xlu0 4
    %1898 = vperm.xlu0 %1897, %v1788
    %v1899 = vpop.permute.xlu0 %1898
    %v1901 = vmul.f32 %v1887, %v458
    %v1902 = vmul.f32 %v1891, %v458
    %v1903 = vmul.f32 %v1895, %v458
    %v1904 = vmul.f32 %v1899, %v458
    %v1905 = vadd.f32 %v1881, %v1901
    %v1906 = vadd.f32 %v1882, %v1902
    %v1907 = vadd.f32 %v1883, %v1903
    %v1908 = vadd.f32 %v1884, %v1904
    %1909 = vset.pattern.permute.xlu0 5
    %1910 = vperm.xlu0 %1909, %v1785
    %v1911 = vpop.permute.xlu0 %1910
    %1913 = vset.pattern.permute.xlu0 5
    %1914 = vperm.xlu0 %1913, %v1786
    %v1915 = vpop.permute.xlu0 %1914
    %1917 = vset.pattern.permute.xlu0 5
    %1918 = vperm.xlu0 %1917, %v1787
    %v1919 = vpop.permute.xlu0 %1918
    %1921 = vset.pattern.permute.xlu0 5
    %1922 = vperm.xlu0 %1921, %v1788
    %v1923 = vpop.permute.xlu0 %1922
    %v1925 = vmul.f32 %v1911, %v486
    %v1926 = vmul.f32 %v1915, %v486
    %v1927 = vmul.f32 %v1919, %v486
    %v1928 = vmul.f32 %v1923, %v486
    %v1929 = vadd.f32 %v1905, %v1925
    %v1930 = vadd.f32 %v1906, %v1926
    %v1931 = vadd.f32 %v1907, %v1927
    %v1932 = vadd.f32 %v1908, %v1928
    %1933 = vset.pattern.permute.xlu0 6
    %1934 = vperm.xlu0 %1933, %v1785
    %v1935 = vpop.permute.xlu0 %1934
    %1937 = vset.pattern.permute.xlu0 6
    %1938 = vperm.xlu0 %1937, %v1786
    %v1939 = vpop.permute.xlu0 %1938
    %1941 = vset.pattern.permute.xlu0 6
    %1942 = vperm.xlu0 %1941, %v1787
    %v1943 = vpop.permute.xlu0 %1942
    %1945 = vset.pattern.permute.xlu0 6
    %1946 = vperm.xlu0 %1945, %v1788
    %v1947 = vpop.permute.xlu0 %1946
    %v1949 = vmul.f32 %v1935, %v514
    %v1950 = vmul.f32 %v1939, %v514
    %v1951 = vmul.f32 %v1943, %v514
    %v1952 = vmul.f32 %v1947, %v514
    %v1953 = vadd.f32 %v1929, %v1949
    %v1954 = vadd.f32 %v1930, %v1950
    %v1955 = vadd.f32 %v1931, %v1951
    %v1956 = vadd.f32 %v1932, %v1952
    %1957 = vset.pattern.permute.xlu0 7
    %1958 = vperm.xlu0 %1957, %v1785
    %v1959 = vpop.permute.xlu0 %1958
    %1961 = vset.pattern.permute.xlu0 7
    %1962 = vperm.xlu0 %1961, %v1786
    %v1963 = vpop.permute.xlu0 %1962
    %1965 = vset.pattern.permute.xlu0 7
    %1966 = vperm.xlu0 %1965, %v1787
    %v1967 = vpop.permute.xlu0 %1966
    %1969 = vset.pattern.permute.xlu0 7
    %1970 = vperm.xlu0 %1969, %v1788
    %v1971 = vpop.permute.xlu0 %1970
    %v1973 = vmul.f32 %v1959, %v542
    %v1974 = vmul.f32 %v1963, %v542
    %v1975 = vmul.f32 %v1967, %v542
    %v1976 = vmul.f32 %v1971, %v542
    %v1977 = vadd.f32 %v1953, %v1973
    %v1978 = vadd.f32 %v1954, %v1974
    %v1979 = vadd.f32 %v1955, %v1975
    %v1980 = vadd.f32 %v1956, %v1976
    %v1981 = vadd.f32 %v1780, %v1977
    %v1982 = vadd.f32 %v1781, %v1978
    %v1983 = vadd.f32 %v1782, %v1979
    %v1984 = vadd.f32 %v1783, %v1980
    %s1985 = scalar_lea.vmem %s9, 96
    %v1986 = vld [vmem:[%s1985] sm:$0xff]
    %v1987 = vld [vmem:[%s1985 + $0x8] sm:$0xff]
    %v1988 = vld [vmem:[%s1985 + $0x10] sm:$0xff]
    %v1989 = vld [vmem:[%s1985 + $0x18] sm:$0xff]
    %1991 = vset.pattern.permute.xlu0 0
    %1992 = vperm.xlu0 %1991, %v1986
    %v1993 = vpop.permute.xlu0 %1992
    %1996 = vset.pattern.permute.xlu0 0
    %1997 = vperm.xlu0 %1996, %v1987
    %v1998 = vpop.permute.xlu0 %1997
    %2001 = vset.pattern.permute.xlu0 0
    %2002 = vperm.xlu0 %2001, %v1988
    %v2003 = vpop.permute.xlu0 %2002
    %2006 = vset.pattern.permute.xlu0 0
    %2007 = vperm.xlu0 %2006, %v1989
    %v2008 = vpop.permute.xlu0 %2007
    %v2010 = vadd.f32 %v1981, %v1993
    %v2011 = vadd.f32 %v1982, %v1998
    %v2012 = vadd.f32 %v1983, %v2003
    %v2013 = vadd.f32 %v1984, %v2008
    %v2014 = vmax.f32 %v2010, 0.0
    %v2015 = vmax.f32 %v2011, 0.0
    %v2016 = vmax.f32 %v2012, 0.0
    %v2017 = vmax.f32 %v2013, 0.0
    %s2018 = scalar_lea.vmem %s10, 6
    %v2019 = vld [vmem:[%s2018] sm:$0x3]
    %s2020 = scalar_lea.vmem %s12, 6
    %v2021 = vld [vmem:[%s2020] sm:$0x3]
    %2023 = vset.pattern.permute.xlu0 0
    %2024 = vperm.xlu0 %2023, %v2021
    %v2025 = vpop.permute.xlu0 %2024
    %v2028 = vsel %vm187, %v2019, 0
    %2030 = vmatprep.subr.mxu0 0.0
    %2031 = vmatpush1.msra.mxu0 %v2014
    %2032 = vmatprep.subr.mxu0 0.0
    %2033 = vmatpush1.msra.mxu0 %v2015
    %2034 = vmatprep.subr.mxu0 0.0
    %2035 = vmatpush1.msra.mxu0 %v2016
    %2036 = vmatprep.subr.mxu0 0.0
    %2037 = vmatpush1.msra.mxu0 %v2017
    %2038 = vmatprep.subr.mxu0 0.0
    %2039 = vmatpush1.msra.mxu0 0.0
    %2040 = vmatprep.subr.mxu0 0.0
    %2041 = vmatpush1.msra.mxu0 0.0
    %2042 = vmatprep.subr.mxu0 0.0
    %2043 = vmatpush1.msra.mxu0 0.0
    %2044 = vmatprep.subr.mxu0 0.0
    %2045 = vmatpush1.msra.mxu0 0.0
    %2046 = vmatprep.subr.mxu0 0.0
    %2047 = vmatpush1.msra.mxu0 0.0
    %2048 = vmatprep.subr.mxu0 0.0
    %2049 = vmatpush1.msra.mxu0 0.0
    %2050 = vmatprep.subr.mxu0 0.0
    %2051 = vmatpush1.msra.mxu0 0.0
    %2052 = vmatprep.subr.mxu0 0.0
    %2053 = vmatpush1.msra.mxu0 0.0
    %2054 = vmatprep.subr.mxu0 0.0
    %2055 = vmatpush1.msra.mxu0 0.0
    %2056 = vmatprep.subr.mxu0 0.0
    %2057 = vmatpush1.msra.mxu0 0.0
    %2058 = vmatprep.subr.mxu0 0.0
    %2059 = vmatpush1.msra.mxu0 0.0
    %2060 = vmatprep.subr.mxu0 0.0
    %2061 = vmatpush1.msra.mxu0 0.0
    %2062 = vmatprep.subr.mxu0 0.0
    %2063 = vmatpush1.msra.mxu0 0.0
    %2064 = vmatprep.subr.mxu0 0.0
    %2065 = vmatpush1.msra.mxu0 0.0
    %2066 = vmatprep.subr.mxu0 0.0
    %2067 = vmatpush1.msra.mxu0 0.0
    %2068 = vmatprep.subr.mxu0 0.0
    %2069 = vmatpush1.msra.mxu0 0.0
    %2070 = vmatprep.subr.mxu0 0.0
    %2071 = vmatpush1.msra.mxu0 0.0
    %2072 = vmatprep.subr.mxu0 0.0
    %2073 = vmatpush1.msra.mxu0 0.0
    %2074 = vmatprep.subr.mxu0 0.0
    %2075 = vmatpush1.msra.mxu0 0.0
    %2076 = vmatprep.subr.mxu0 0.0
    %2077 = vmatpush1.msra.mxu0 0.0
    %2078 = vmatprep.subr.mxu0 0.0
    %2079 = vmatpush1.msra.mxu0 0.0
    %2080 = vmatprep.subr.mxu0 0.0
    %2081 = vmatpush1.msra.mxu0 0.0
    %2082 = vmatprep.subr.mxu0 0.0
    %2083 = vmatpush1.msra.mxu0 0.0
    %2084 = vmatprep.subr.mxu0 0.0
    %2085 = vmatpush1.msra.mxu0 0.0
    %2086 = vmatprep.subr.mxu0 0.0
    %2087 = vmatpush1.msra.mxu0 0.0
    %2088 = vmatprep.subr.mxu0 0.0
    %2089 = vmatpush1.msra.mxu0 0.0
    %2090 = vmatprep.subr.mxu0 0.0
    %2091 = vmatpush1.msra.mxu0 0.0
    %2092 = vmatprep.subr.mxu0 0.0
    %2093 = vmatpush1.msra.mxu0 0.0
    %2094 = vmatprep.mubr.f32.mxu0 0.0
    %2095 = vmatmul.mubr.f32.gmra.mrb[0].mxu0 %v2028
    %v2096 = vpop.f32.mrb[0].mxu0
    %v2097 = vadd.f32 %v2025, %v2096
    %v2098 = vpop.f32.mrb[0].mxu0
    %2099 = vdwg.mxu0
    %s2100 = scalar_lea.vmem %s11, 6
    %v2101 = vld [vmem:[%s2100] sm:$0x3]
    %s2102 = scalar_lea.vmem %s13, 6
    %v2103 = vld [vmem:[%s2102] sm:$0x3]
    %2105 = vset.pattern.permute.xlu0 0
    %2106 = vperm.xlu0 %2105, %v2103
    %v2107 = vpop.permute.xlu0 %2106
    %v2110 = vsel %vm187, %v2101, 0
    %2112 = vmatprep.subr.mxu0 0.0
    %2113 = vmatpush1.msra.mxu0 %v2014
    %2114 = vmatprep.subr.mxu0 0.0
    %2115 = vmatpush1.msra.mxu0 %v2015
    %2116 = vmatprep.subr.mxu0 0.0
    %2117 = vmatpush1.msra.mxu0 %v2016
    %2118 = vmatprep.subr.mxu0 0.0
    %2119 = vmatpush1.msra.mxu0 %v2017
    %2120 = vmatprep.subr.mxu0 0.0
    %2121 = vmatpush1.msra.mxu0 0.0
    %2122 = vmatprep.subr.mxu0 0.0
    %2123 = vmatpush1.msra.mxu0 0.0
    %2124 = vmatprep.subr.mxu0 0.0
    %2125 = vmatpush1.msra.mxu0 0.0
    %2126 = vmatprep.subr.mxu0 0.0
    %2127 = vmatpush1.msra.mxu0 0.0
    %2128 = vmatprep.subr.mxu0 0.0
    %2129 = vmatpush1.msra.mxu0 0.0
    %2130 = vmatprep.subr.mxu0 0.0
    %2131 = vmatpush1.msra.mxu0 0.0
    %2132 = vmatprep.subr.mxu0 0.0
    %2133 = vmatpush1.msra.mxu0 0.0
    %2134 = vmatprep.subr.mxu0 0.0
    %2135 = vmatpush1.msra.mxu0 0.0
    %2136 = vmatprep.subr.mxu0 0.0
    %2137 = vmatpush1.msra.mxu0 0.0
    %2138 = vmatprep.subr.mxu0 0.0
    %2139 = vmatpush1.msra.mxu0 0.0
    %2140 = vmatprep.subr.mxu0 0.0
    %2141 = vmatpush1.msra.mxu0 0.0
    %2142 = vmatprep.subr.mxu0 0.0
    %2143 = vmatpush1.msra.mxu0 0.0
    %2144 = vmatprep.subr.mxu0 0.0
    %2145 = vmatpush1.msra.mxu0 0.0
    %2146 = vmatprep.subr.mxu0 0.0
    %2147 = vmatpush1.msra.mxu0 0.0
    %2148 = vmatprep.subr.mxu0 0.0
    %2149 = vmatpush1.msra.mxu0 0.0
    %2150 = vmatprep.subr.mxu0 0.0
    %2151 = vmatpush1.msra.mxu0 0.0
    %2152 = vmatprep.subr.mxu0 0.0
    %2153 = vmatpush1.msra.mxu0 0.0
    %2154 = vmatprep.subr.mxu0 0.0
    %2155 = vmatpush1.msra.mxu0 0.0
    %2156 = vmatprep.subr.mxu0 0.0
    %2157 = vmatpush1.msra.mxu0 0.0
    %2158 = vmatprep.subr.mxu0 0.0
    %2159 = vmatpush1.msra.mxu0 0.0
    %2160 = vmatprep.subr.mxu0 0.0
    %2161 = vmatpush1.msra.mxu0 0.0
    %2162 = vmatprep.subr.mxu0 0.0
    %2163 = vmatpush1.msra.mxu0 0.0
    %2164 = vmatprep.subr.mxu0 0.0
    %2165 = vmatpush1.msra.mxu0 0.0
    %2166 = vmatprep.subr.mxu0 0.0
    %2167 = vmatpush1.msra.mxu0 0.0
    %2168 = vmatprep.subr.mxu0 0.0
    %2169 = vmatpush1.msra.mxu0 0.0
    %2170 = vmatprep.subr.mxu0 0.0
    %2171 = vmatpush1.msra.mxu0 0.0
    %2172 = vmatprep.subr.mxu0 0.0
    %2173 = vmatpush1.msra.mxu0 0.0
    %2174 = vmatprep.subr.mxu0 0.0
    %2175 = vmatpush1.msra.mxu0 0.0
    %2176 = vmatprep.mubr.f32.mxu0 0.0
    %2177 = vmatmul.mubr.f32.gmra.mrb[0].mxu0 %v2110
    %v2178 = vpop.f32.mrb[0].mxu0
    %v2179 = vadd.f32 %v2107, %v2178
    %v2180 = vpop.f32.mrb[0].mxu0
    %2181 = vdwg.mxu0
    %v2182 = vxor.u32 %v2179, 2147483648
    %v2183 = vmul.f32 %v2182, 1.442695
    %v2184 = vpow.pop %v2183
    %v2185 = vadd.f32 %v2184, 1.0
    %v2186 = vrcp.pop %v2185
    %v2187 = vmul.f32 1.0, %v2186
    %v2188 = vadd.f32 %v2187, 0.001
    %v2189 = vmul.f32 %v1234, %v2188
    %v2190 = vadd.f32 %v2189, %v2097
    %v2191 = vlog2.pop %v2188
    %v2192 = vmul.f32 %v2191, 0.6931472
    %v2193 = vsel %vm758, %v2192, 0.0
    %v2194 = vrot.slane %v2193, 4
    %v2195 = vadd.f32 %v2193, %v2194
    %v2196 = vrot.slane %v2195, 2
    %v2197 = vadd.f32 %v2195, %v2196
    %v2198 = vrot.slane %v2197, 1
    %v2199 = vadd.f32 %v2197, %v2198
    %v2200 = vadd.f32 %v1722, %v2199
    %v2202 = vrot.slane %v1712, 6
    %vm2204 = vcmask 1041408
    %v2205 = vsel %vm2204, %v2190, %v2202
    %vm2206 = vcmask 1043456
    %v2207 = vsel %vm2206, %v2205, %v2200
    %vm2208 = vcmask 61440
    %2209 = vst.msk [vmem:[#allocation2] sm:$0x1f] %vm2208, %v2207
    // Predicated region
    $region58: #{tpu_custom_call.1} parent=1 // pred_check
      _
    $region59: #{tpu_custom_call.1} parent=1 // pred_check_branch
      %2211 = sbr.rel (0) target = $region61
    $region60: #{tpu_custom_call.1} parent=1 // pred_region
      %s2213 = ssub.s32 128, 128
      %2214 = vsyncadd [#allocation3], %s2213
      %s2216 = sshll.u32 [#allocation2], 4
      %s2217 = int_to_ptr.vmem [resolvable:$true] %s2216
      %2219 = dma.vmem_to_hbm [thread:$0]  %s2217, 128, %s14, [#allocation3]
    $region61: #{tpu_custom_call.1} parent=1 // pred_fallthru
      _
    // Predicated region
    $region62: #{tpu_custom_call.1} parent=1 // pred_check
      _
    $region63: #{tpu_custom_call.1} parent=1 // pred_check_branch
      %2221 = sbr.rel (0) target = $region65
    $region64: #{tpu_custom_call.1} parent=1 // pred_region
      %2222 = dma.done [#allocation3], 128
    $region65: #{tpu_custom_call.1} parent=1 // pred_fallthru
      _
    %2223 = vsyncpa [#allocation3], 1

</llo_original>
